<compile_context>
chip_gen: v6e
topology: v6e:2x2x1
jax: 0.10.0
libtpu: 0.0.40
codegen_flags: <defaults>
</compile_context>

<pallas_src>
import functools

import jax
import jax.numpy as jnp
from jax.experimental import pallas as pl
from jax.experimental.pallas import tpu as pltpu


def _pick_co_tile(cout, limit=128):
    """Largest divisor of cout that is <= limit and a multiple of 8; else cout (full block)."""
    best = cout
    for d in range(8, min(cout, limit) + 1, 8):
        if cout % d == 0:
            best = d
    return best


def _conv_polyphase_kernel(x_ref, w_ref, mask_ref, y_ref, s_ref, rhs_ref, *, H, W, Cin):
    """Polyphase transposed-conv tile for one batch element / one Cout tile.

    x_ref:    (1, Cin, Lx)  f32       flattened zero-padded NCHW image (row stride W+2).
    w_ref:    (2, 2, ct, 4*Cin) bf16  per-parity weights, contraction ordered (dh, dw, ci).
    mask_ref: (1, L)  f32             1.0 on real output columns, 0.0 on the junk columns.
    y_ref:    (1, 2, 2, ct, L) bf16   parity-major conv output (lane-dense).
    s_ref:    (1, 2, ct, 1) f32       per-channel [sum, sum-of-squares] partials (valid cols).
    rhs_ref:  (2, 4*Cin, L) bf16      double-buffered scratch holding the stacked 2x2 taps.
    """
    Wp2 = W + 2
    L = H * Wp2
    ct = w_ref.shape[2]
    mask = mask_ref[...]                                   # (1, L) f32
    tot_sum = jnp.zeros((ct, 1), jnp.float32)
    tot_sq = jnp.zeros((ct, 1), jnp.float32)
    for r in range(2):          # output row parity
        for c in range(2):      # output col parity
            slot = (2 * r + c) & 1   # alternate staging buffers -> copies can overlap the MXU
            # Stack the four 2x2 taps along the contraction axis (contiguous copies, cast bf16).
            for t, (dh, dw) in enumerate(((0, 0), (0, 1), (1, 0), (1, 1))):
                off = (r + dh) * Wp2 + (c + dw)
                rhs_ref[slot, t * Cin:(t + 1) * Cin, :] = (
                    x_ref[0, :, off:off + L].astype(jnp.bfloat16))
            # One bf16 MXU matmul per parity, contraction = 4*Cin, f32 accumulation.
            acc = jnp.dot(w_ref[r, c], rhs_ref[slot],
                          preferred_element_type=jnp.float32)        # (ct, L) f32
            y_ref[0, r, c] = acc.astype(y_ref.dtype)
            # Single-pass BN partials from the f32 accumulator (junk columns masked out).
            accm = acc * mask
            tot_sum = tot_sum + jnp.sum(accm, axis=1, keepdims=True)
            tot_sq = tot_sq + jnp.sum(accm * acc, axis=1, keepdims=True)
    s_ref[0, 0] = tot_sum
    s_ref[0, 1] = tot_sq


def _bn_interleave_kernel(y_ref, scale_ref, shift_ref, eo_ref, o_ref, *, H, W):
    """BN affine + ReLU + junk-column strip + depth-to-space interleave, fused.

    y_ref:     (1, 2, 2, ct, L) bf16  parity-major conv output (L = H*(W+2)).
    scale_ref: (ct, 1) f32            gamma * rsqrt(var + eps).
    shift_ref: (ct, 1) f32            beta - mean * scale.
    eo_ref:    (2, W, 2W) f32         0/1 scatter matrices for even/odd output columns.
    o_ref:     (1, ct, 2H, 2W)        final NCHW output block.
    """
    Wp2 = W + 2
    scale = scale_ref[...]
    shift = shift_ref[...]
    even = eo_ref[0]
    odd = eo_ref[1]
    # TODO(synk): switch to lax.fori_loop for very large H to bound unrolled code size.
    for i in range(H):
        off = i * Wp2          # even offset -> clean bf16 lane slices
        for r in range(2):
            a = y_ref[0, r, 0, :, off:off + W].astype(jnp.float32)   # col parity 0, (ct, W)
            b = y_ref[0, r, 1, :, off:off + W].astype(jnp.float32)   # col parity 1, (ct, W)
            a = jnp.maximum(a * scale + shift, 0.0)
            b = jnp.maximum(b * scale + shift, 0.0)
            # Column interleave via two tiny 0/1 scatter matmuls (MXU idle in this pass):
            # row[:, 2j] = a[:, j], row[:, 2j+1] = b[:, j].
            row = (jnp.dot(a, even, preferred_element_type=jnp.float32)
                   + jnp.dot(b, odd, preferred_element_type=jnp.float32))
            o_ref[0, :, 2 * i + r, :] = row.astype(o_ref.dtype)


def up_transpose2d(x_nchw, w, b, gamma, beta, *, kernel_size=4, stride=2, eps=1e-5):
    """x_nchw: (N, Cin, H, W); w: (Cin, Cout, 4, 4) (PyTorch ConvTranspose2d layout);
    b/gamma/beta: (Cout,). Returns (N, Cout, 2H, 2W) in NCHW."""
    assert kernel_size == 4 and stride == 2, "polyphase path assumes K=4, stride=2, pad=1"
    N, Cin, H, W = x_nchw.shape
    Cout = w.shape[1]
    Ho, Wo = 2 * H, 2 * W
    Wp2 = W + 2
    L = H * Wp2                       # per-parity flattened spatial length (incl. junk cols)

    # Conv bias is exactly cancelled by the train-mode BatchNorm mean subtraction.
    del b

    # ---- glue (plain JAX; only small work on the UNDILATED input) --------------------------
    xpad = jnp.pad(x_nchw.astype(jnp.float32), ((0, 0), (0, 0), (1, 1), (1, 1)))
    # Flatten padded spatial; +2 guard elements keep the largest tap offset in bounds.
    xflat = jnp.pad(xpad.reshape(N, Cin, (H + 2) * Wp2), ((0, 0), (0, 0), (0, 2)))
    Lx = xflat.shape[-1]

    # Per-parity weights: wp[r, c, co, (dh*2+dw)*Cin + ci] = w[ci, co, 3-r-2*dh, 3-c-2*dw]
    wp = jnp.stack([
        jnp.stack([
            jnp.concatenate([
                jnp.transpose(w[:, :, 3 - r - 2 * dh, 3 - c - 2 * dw], (1, 0))
                for dh in (0, 1) for dw in (0, 1)], axis=1)          # (Cout, 4*Cin)
            for c in (0, 1)], axis=0)
        for r in (0, 1)], axis=0).astype(jnp.bfloat16)               # (2, 2, Cout, 4*Cin)

    # 1.0 on real output columns, 0.0 on the 2 junk columns per row.
    colmask = jnp.broadcast_to((jnp.arange(Wp2) < W).astype(jnp.float32), (H, Wp2))
    colmask = colmask.reshape(1, L)

    # Adaptive Cout tiling: largest divisor <= 128 that is a multiple of 8 (else full Cout).
    co_tile = _pick_co_tile(Cout)
    n_co = Cout // co_tile

    # ---- kernel A: polyphase transposed conv + BN partial statistics ----------------------
    conv_cost = pl.CostEstimate(
        flops=2 * N * 4 * L * (4 * Cin) * Cout,
        transcendentals=0,
        bytes_accessed=(4 * xflat.size * n_co + 2 * wp.size * N
                        + 2 * N * 4 * Cout * L + 4 * N * 2 * Cout))
    conv_pm, stats = pl.pallas_call(
        functools.partial(_conv_polyphase_kernel, H=H, W=W, Cin=Cin),
        out_shape=(
            jax.ShapeDtypeStruct((N, 2, 2, Cout, L), jnp.bfloat16),  # parity-major conv out
            jax.ShapeDtypeStruct((N, 2, Cout, 1), jnp.float32),      # [sum, sumsq] partials
        ),
        grid=(N, n_co),
        in_specs=[
            pl.BlockSpec((1, Cin, Lx), lambda n, j: (n, 0, 0)),
            pl.BlockSpec((2, 2, co_tile, 4 * Cin), lambda n, j: (0, 0, j, 0)),
            pl.BlockSpec((1, L), lambda n, j: (0, 0)),
        ],
        out_specs=(
            pl.BlockSpec((1, 2, 2, co_tile, L), lambda n, j: (n, 0, 0, j, 0)),
            pl.BlockSpec((1, 2, co_tile, 1), lambda n, j: (n, 0, j, 0)),
        ),
        scratch_shapes=[pltpu.VMEM((2, 4 * Cin, L), jnp.bfloat16)],
        compiler_params=pltpu.CompilerParams(
            dimension_semantics=("parallel", "parallel"),
            vmem_limit_bytes=64 * 1024 * 1024),
        cost_estimate=conv_cost,
    )(xflat, wp, colmask)

    # ---- tiny per-channel reduction -> BN scale / shift (plain JAX on (Cout,) vectors) ----
    count = N * Ho * Wo
    s1 = jnp.sum(stats[:, 0, :, 0], axis=0)
    s2 = jnp.sum(stats[:, 1, :, 0], axis=0)
    mean = s1 / count
    var = jnp.maximum(s2 / count - mean * mean, 0.0)       # biased (train-mode) variance
    inv = jax.lax.rsqrt(var + eps)
    g32 = gamma.astype(jnp.float32)
    scale = (g32 * inv).reshape(Cout, 1)
    shift = (beta.astype(jnp.float32) - mean * g32 * inv).reshape(Cout, 1)

    # 0/1 scatter matrices used by the fused in-kernel column interleave.
    eye = jnp.eye(W, dtype=jnp.float32)
    eo = jnp.zeros((2, W, Wo), jnp.float32)
    eo = eo.at[0, :, 0::2].set(eye).at[1, :, 1::2].set(eye)

    # ---- kernel B: BN affine + ReLU + junk-strip + depth-to-space, writes NCHW directly ----
    bn_cost = pl.CostEstimate(
        flops=2 * N * 2 * H * 2 * Cout * W * Wo + 6 * N * Cout * Ho * Wo,
        transcendentals=0,
        bytes_accessed=2 * conv_pm.size + N * Cout * Ho * Wo * x_nchw.dtype.itemsize)
    out = pl.pallas_call(
        functools.partial(_bn_interleave_kernel, H=H, W=W),
        out_shape=jax.ShapeDtypeStruct((N, Cout, Ho, Wo), x_nchw.dtype),
        grid=(N, n_co),
        in_specs=[
            pl.BlockSpec((1, 2, 2, co_tile, L), lambda n, j: (n, 0, 0, j, 0)),
            pl.BlockSpec((co_tile, 1), lambda n, j: (j, 0)),
            pl.BlockSpec((co_tile, 1), lambda n, j: (j, 0)),
            pl.BlockSpec((2, W, Wo), lambda n, j: (0, 0, 0)),
        ],
        out_specs=pl.BlockSpec((1, co_tile, Ho, Wo), lambda n, j: (n, j, 0, 0)),
        compiler_params=pltpu.CompilerParams(
            dimension_semantics=("parallel", "parallel"),
            vmem_limit_bytes=64 * 1024 * 1024),
        cost_estimate=bn_cost,
    )(conv_pm, scale, shift, eo)
    return out


def _reference_forward(x, w, b, gamma, beta, eps=1e-5):
    """Pure-JAX reference (matches PyTorch ConvTranspose2d + train-mode BatchNorm2d + ReLU)."""
    K = w.shape[-1]
    w_oihw = jnp.transpose(w[:, :, ::-1, ::-1], (1, 0, 2, 3))   # (Cout, Cin, K, K)
    pad = K - 1 - (K // 2 - 1)
    y = jax.lax.conv_general_dilated(
        x, w_oihw, window_strides=(1, 1), padding=[(pad, pad), (pad, pad)],
        lhs_dilation=(2, 2), dimension_numbers=('NCHW', 'OIHW', 'NCHW'))
    y = y + b[None, :, None, None]
    mean = jnp.mean(y, axis=(0, 2, 3), keepdims=True)
    var = jnp.mean((y - mean) ** 2, axis=(0, 2, 3), keepdims=True)
    yn = (y - mean) * jax.lax.rsqrt(var + eps)
    yn = yn * gamma[None, :, None, None] + beta[None, :, None, None]
    return jnp.maximum(yn, 0.0)


if __name__ == "__main__":
    N, Cin, Cout, H, W, K = 2, 4, 8, 16, 16, 4

    key = jax.random.PRNGKey(0)
    kx, kw, kb = jax.random.split(key, 3)
    x = jax.random.normal(kx, (N, Cin, H, W), jnp.float32)
    # ConvTranspose2d weight layout: (Cin, Cout, K, K).
    w = jax.random.normal(kw, (Cin, Cout, K, K), jnp.float32) * 0.05
    b = jax.random.normal(kb, (Cout,), jnp.float32) * 0.05
    gamma = jnp.ones((Cout,), jnp.float32)   # BatchNorm2d default affine init
    beta = jnp.zeros((Cout,), jnp.float32)

    out = up_transpose2d(x, w, b, gamma, beta)
    out = jax.block_until_ready(out)

    assert out.shape == (N, Cout, 2 * H, 2 * W), out.shape
    ref = _reference_forward(x, w, b, gamma, beta)
    # bf16 MXU operands + bf16 conv intermediate -> loosened tolerance vs the pure-f32 reference.
    if not jnp.allclose(out, ref, atol=5e-2, rtol=5e-2):
        raise AssertionError(
            f"Pallas kernel does not match reference "
            f"(max abs err {jnp.max(jnp.abs(out - ref))})")

    print("KERNEL_OK")
</pallas_src>

<mosaic_0001>
module attributes {stable_mosaic.version = 11 : i64} {
  func.func @_conv_polyphase_kernel(%arg0: i32, %arg1: i32, %arg2: memref<1x4x326xf32, #tpu.memory_space<vmem>>, %arg3: memref<2x2x8x16xbf16, #tpu.memory_space<vmem>>, %arg4: memref<1x288xf32, #tpu.memory_space<vmem>>, %arg5: memref<1x2x2x8x288xbf16, #tpu.memory_space<vmem>>, %arg6: memref<1x2x8x1xf32, #tpu.memory_space<vmem>>, %arg7: memref<2x16x288xbf16, #tpu.memory_space<vmem>>) attributes {dimension_semantics = [#tpu.dimension_semantics<parallel>, #tpu.dimension_semantics<parallel>], iteration_bounds = array<i64: 2, 1>, scalar_prefetch = 0 : i64, scratch_operands = 1 : i64, tpu.core_type = #tpu.core_type<tc>, window_params = [{transform_indices = @transform_0, window_bounds = array<i64: 1, 4, 326>}, {transform_indices = @transform_1, window_bounds = array<i64: 2, 2, 8, 16>}, {pipeline_mode = #tpu.pipeline_mode<synchronous>, transform_indices = @transform_2, window_bounds = array<i64: 1, 288>}, {transform_indices = @transform_3, window_bounds = array<i64: 1, 2, 2, 8, 288>}, {transform_indices = @transform_4, window_bounds = array<i64: 1, 2, 8, 1>}]} {
    %c0 = arith.constant 0 : index
    %c0_0 = arith.constant 0 : index
    %0 = vector.load %arg4[%c0, %c0_0] : memref<1x288xf32, #tpu.memory_space<vmem>>, vector<1x288xf32>
    %cst = arith.constant 0.000000e+00 : f32
    %1 = vector.broadcast %cst : f32 to vector<8x1xf32>
    %cst_1 = arith.constant 0.000000e+00 : f32
    %2 = vector.broadcast %cst_1 : f32 to vector<8x1xf32>
    %c0_2 = arith.constant 0 : index
    %c0_3 = arith.constant 0 : index
    %c0_4 = arith.constant 0 : index
    %3 = vector.load %arg2[%c0_2, %c0_3, %c0_4] : memref<1x4x326xf32, #tpu.memory_space<vmem>>, vector<1x4x288xf32>
    %4 = vector.shape_cast %3 : vector<1x4x288xf32> to vector<4x288xf32>
    %5 = arith.truncf %4 : vector<4x288xf32> to vector<4x288xbf16>
    %c0_5 = arith.constant 0 : index
    %c0_6 = arith.constant 0 : index
    %c0_7 = arith.constant 0 : index
    %6 = vector.load %arg7[%c0_5, %c0_6, %c0_7] : memref<2x16x288xbf16, #tpu.memory_space<vmem>>, vector<1x4x288xbf16>
    %7 = vector.shape_cast %6 : vector<1x4x288xbf16> to vector<4x288xbf16>
    %8 = vector.shape_cast %5 : vector<4x288xbf16> to vector<1x4x288xbf16>
    tpu.vector_store %arg7[%c0_5, %c0_6, %c0_7], %8 {strides = array<i32>} : memref<2x16x288xbf16, #tpu.memory_space<vmem>>, vector<1x4x288xbf16>,
    %c0_8 = arith.constant 0 : index
    %c0_9 = arith.constant 0 : index
    %c1 = arith.constant 1 : index
    %9 = vector.load %arg2[%c0_8, %c0_9, %c1] : memref<1x4x326xf32, #tpu.memory_space<vmem>>, vector<1x4x288xf32>
    %10 = vector.shape_cast %9 : vector<1x4x288xf32> to vector<4x288xf32>
    %11 = arith.truncf %10 : vector<4x288xf32> to vector<4x288xbf16>
    %c0_10 = arith.constant 0 : index
    %c4 = arith.constant 4 : index
    %c0_11 = arith.constant 0 : index
    %12 = vector.load %arg7[%c0_10, %c4, %c0_11] : memref<2x16x288xbf16, #tpu.memory_space<vmem>>, vector<1x4x288xbf16>
    %13 = vector.shape_cast %12 : vector<1x4x288xbf16> to vector<4x288xbf16>
    %14 = vector.shape_cast %11 : vector<4x288xbf16> to vector<1x4x288xbf16>
    tpu.vector_store %arg7[%c0_10, %c4, %c0_11], %14 {strides = array<i32>} : memref<2x16x288xbf16, #tpu.memory_space<vmem>>, vector<1x4x288xbf16>,
    %c0_12 = arith.constant 0 : index
    %c0_13 = arith.constant 0 : index
    %c18 = arith.constant 18 : index
    %15 = vector.load %arg2[%c0_12, %c0_13, %c18] : memref<1x4x326xf32, #tpu.memory_space<vmem>>, vector<1x4x288xf32>
    %16 = vector.shape_cast %15 : vector<1x4x288xf32> to vector<4x288xf32>
    %17 = arith.truncf %16 : vector<4x288xf32> to vector<4x288xbf16>
    %c0_14 = arith.constant 0 : index
    %c8 = arith.constant 8 : index
    %c0_15 = arith.constant 0 : index
    %18 = vector.load %arg7[%c0_14, %c8, %c0_15] : memref<2x16x288xbf16, #tpu.memory_space<vmem>>, vector<1x4x288xbf16>
    %19 = vector.shape_cast %18 : vector<1x4x288xbf16> to vector<4x288xbf16>
    %20 = vector.shape_cast %17 : vector<4x288xbf16> to vector<1x4x288xbf16>
    tpu.vector_store %arg7[%c0_14, %c8, %c0_15], %20 {strides = array<i32>} : memref<2x16x288xbf16, #tpu.memory_space<vmem>>, vector<1x4x288xbf16>,
    %c0_16 = arith.constant 0 : index
    %c0_17 = arith.constant 0 : index
    %c19 = arith.constant 19 : index
    %21 = vector.load %arg2[%c0_16, %c0_17, %c19] : memref<1x4x326xf32, #tpu.memory_space<vmem>>, vector<1x4x288xf32>
    %22 = vector.shape_cast %21 : vector<1x4x288xf32> to vector<4x288xf32>
    %23 = arith.truncf %22 : vector<4x288xf32> to vector<4x288xbf16>
    %c0_18 = arith.constant 0 : index
    %c12 = arith.constant 12 : index
    %c0_19 = arith.constant 0 : index
    %24 = vector.load %arg7[%c0_18, %c12, %c0_19] : memref<2x16x288xbf16, #tpu.memory_space<vmem>>, vector<1x4x288xbf16>
    %25 = vector.shape_cast %24 : vector<1x4x288xbf16> to vector<4x288xbf16>
    %26 = vector.shape_cast %23 : vector<4x288xbf16> to vector<1x4x288xbf16>
    tpu.vector_store %arg7[%c0_18, %c12, %c0_19], %26 {strides = array<i32>} : memref<2x16x288xbf16, #tpu.memory_space<vmem>>, vector<1x4x288xbf16>,
    %c0_20 = arith.constant 0 : index
    %c0_21 = arith.constant 0 : index
    %c0_22 = arith.constant 0 : index
    %c0_23 = arith.constant 0 : index
    %27 = vector.load %arg3[%c0_20, %c0_21, %c0_22, %c0_23] : memref<2x2x8x16xbf16, #tpu.memory_space<vmem>>, vector<1x1x8x16xbf16>
    %28 = vector.shape_cast %27 : vector<1x1x8x16xbf16> to vector<8x16xbf16>
    %c0_24 = arith.constant 0 : index
    %c0_25 = arith.constant 0 : index
    %c0_26 = arith.constant 0 : index
    %29 = vector.load %arg7[%c0_24, %c0_25, %c0_26] : memref<2x16x288xbf16, #tpu.memory_space<vmem>>, vector<1x16x288xbf16>
    %30 = vector.shape_cast %29 : vector<1x16x288xbf16> to vector<16x288xbf16>
    %cst_27 = arith.constant dense<0.000000e+00> : vector<8x288xf32>
    %31 = tpu.matmul %28, %30, %cst_27 {dimension_numbers = #tpu.dot_dimension_numbers<[1], [0], [0], [1], [0, 0, 1, 1], [], []>} : vector<8x16xbf16>, vector<16x288xbf16>, vector<8x288xf32> -> vector<8x288xf32>
    %32 = arith.truncf %31 : vector<8x288xf32> to vector<8x288xbf16>
    %c0_28 = arith.constant 0 : index
    %c0_29 = arith.constant 0 : index
    %c0_30 = arith.constant 0 : index
    %c0_31 = arith.constant 0 : index
    %c0_32 = arith.constant 0 : index
    %33 = vector.load %arg5[%c0_28, %c0_29, %c0_30, %c0_31, %c0_32] : memref<1x2x2x8x288xbf16, #tpu.memory_space<vmem>>, vector<1x1x1x8x288xbf16>
    %34 = vector.shape_cast %33 : vector<1x1x1x8x288xbf16> to vector<8x288xbf16>
    %35 = vector.shape_cast %32 : vector<8x288xbf16> to vector<1x1x1x8x288xbf16>
    tpu.vector_store %arg5[%c0_28, %c0_29, %c0_30, %c0_31, %c0_32], %35 {strides = array<i32>} : memref<1x2x2x8x288xbf16, #tpu.memory_space<vmem>>, vector<1x1x1x8x288xbf16>,
    %36 = vector.broadcast %0 : vector<1x288xf32> to vector<8x288xf32>
    %37 = arith.mulf %31, %36 : vector<8x288xf32>
    %cst_33 = arith.constant dense<0.000000e+00> : vector<8xf32>
    %38 = vector.multi_reduction <add>, %37, %cst_33 [1] : vector<8x288xf32> to vector<8xf32>
    %39 = vector.shape_cast %38 : vector<8xf32> to vector<8x1xf32>
    %40 = arith.addf %1, %39 : vector<8x1xf32>
    %41 = arith.mulf %37, %31 : vector<8x288xf32>
    %cst_34 = arith.constant dense<0.000000e+00> : vector<8xf32>
    %42 = vector.multi_reduction <add>, %41, %cst_34 [1] : vector<8x288xf32> to vector<8xf32>
    %43 = vector.shape_cast %42 : vector<8xf32> to vector<8x1xf32>
    %44 = arith.addf %2, %43 : vector<8x1xf32>
    %c0_35 = arith.constant 0 : index
    %c0_36 = arith.constant 0 : index
    %c1_37 = arith.constant 1 : index
    %45 = vector.load %arg2[%c0_35, %c0_36, %c1_37] : memref<1x4x326xf32, #tpu.memory_space<vmem>>, vector<1x4x288xf32>
    %46 = vector.shape_cast %45 : vector<1x4x288xf32> to vector<4x288xf32>
    %47 = arith.truncf %46 : vector<4x288xf32> to vector<4x288xbf16>
    %c1_38 = arith.constant 1 : index
    %c0_39 = arith.constant 0 : index
    %c0_40 = arith.constant 0 : index
    %48 = vector.load %arg7[%c1_38, %c0_39, %c0_40] : memref<2x16x288xbf16, #tpu.memory_space<vmem>>, vector<1x4x288xbf16>
    %49 = vector.shape_cast %48 : vector<1x4x288xbf16> to vector<4x288xbf16>
    %50 = vector.shape_cast %47 : vector<4x288xbf16> to vector<1x4x288xbf16>
    tpu.vector_store %arg7[%c1_38, %c0_39, %c0_40], %50 {strides = array<i32>} : memref<2x16x288xbf16, #tpu.memory_space<vmem>>, vector<1x4x288xbf16>,
    %c0_41 = arith.constant 0 : index
    %c0_42 = arith.constant 0 : index
    %c2 = arith.constant 2 : index
    %51 = vector.load %arg2[%c0_41, %c0_42, %c2] : memref<1x4x326xf32, #tpu.memory_space<vmem>>, vector<1x4x288xf32>
    %52 = vector.shape_cast %51 : vector<1x4x288xf32> to vector<4x288xf32>
    %53 = arith.truncf %52 : vector<4x288xf32> to vector<4x288xbf16>
    %c1_43 = arith.constant 1 : index
    %c4_44 = arith.constant 4 : index
    %c0_45 = arith.constant 0 : index
    %54 = vector.load %arg7[%c1_43, %c4_44, %c0_45] : memref<2x16x288xbf16, #tpu.memory_space<vmem>>, vector<1x4x288xbf16>
    %55 = vector.shape_cast %54 : vector<1x4x288xbf16> to vector<4x288xbf16>
    %56 = vector.shape_cast %53 : vector<4x288xbf16> to vector<1x4x288xbf16>
    tpu.vector_store %arg7[%c1_43, %c4_44, %c0_45], %56 {strides = array<i32>} : memref<2x16x288xbf16, #tpu.memory_space<vmem>>, vector<1x4x288xbf16>,
    %c0_46 = arith.constant 0 : index
    %c0_47 = arith.constant 0 : index
    %c19_48 = arith.constant 19 : index
    %57 = vector.load %arg2[%c0_46, %c0_47, %c19_48] : memref<1x4x326xf32, #tpu.memory_space<vmem>>, vector<1x4x288xf32>
    %58 = vector.shape_cast %57 : vector<1x4x288xf32> to vector<4x288xf32>
    %59 = arith.truncf %58 : vector<4x288xf32> to vector<4x288xbf16>
    %c1_49 = arith.constant 1 : index
    %c8_50 = arith.constant 8 : index
    %c0_51 = arith.constant 0 : index
    %60 = vector.load %arg7[%c1_49, %c8_50, %c0_51] : memref<2x16x288xbf16, #tpu.memory_space<vmem>>, vector<1x4x288xbf16>
    %61 = vector.shape_cast %60 : vector<1x4x288xbf16> to vector<4x288xbf16>
    %62 = vector.shape_cast %59 : vector<4x288xbf16> to vector<1x4x288xbf16>
    tpu.vector_store %arg7[%c1_49, %c8_50, %c0_51], %62 {strides = array<i32>} : memref<2x16x288xbf16, #tpu.memory_space<vmem>>, vector<1x4x288xbf16>,
    %c0_52 = arith.constant 0 : index
    %c0_53 = arith.constant 0 : index
    %c20 = arith.constant 20 : index
    %63 = vector.load %arg2[%c0_52, %c0_53, %c20] : memref<1x4x326xf32, #tpu.memory_space<vmem>>, vector<1x4x288xf32>
    %64 = vector.shape_cast %63 : vector<1x4x288xf32> to vector<4x288xf32>
    %65 = arith.truncf %64 : vector<4x288xf32> to vector<4x288xbf16>
    %c1_54 = arith.constant 1 : index
    %c12_55 = arith.constant 12 : index
    %c0_56 = arith.constant 0 : index
    %66 = vector.load %arg7[%c1_54, %c12_55, %c0_56] : memref<2x16x288xbf16, #tpu.memory_space<vmem>>, vector<1x4x288xbf16>
    %67 = vector.shape_cast %66 : vector<1x4x288xbf16> to vector<4x288xbf16>
    %68 = vector.shape_cast %65 : vector<4x288xbf16> to vector<1x4x288xbf16>
    tpu.vector_store %arg7[%c1_54, %c12_55, %c0_56], %68 {strides = array<i32>} : memref<2x16x288xbf16, #tpu.memory_space<vmem>>, vector<1x4x288xbf16>,
    %c0_57 = arith.constant 0 : index
    %c1_58 = arith.constant 1 : index
    %c0_59 = arith.constant 0 : index
    %c0_60 = arith.constant 0 : index
    %69 = vector.load %arg3[%c0_57, %c1_58, %c0_59, %c0_60] : memref<2x2x8x16xbf16, #tpu.memory_space<vmem>>, vector<1x1x8x16xbf16>
    %70 = vector.shape_cast %69 : vector<1x1x8x16xbf16> to vector<8x16xbf16>
    %c1_61 = arith.constant 1 : index
    %c0_62 = arith.constant 0 : index
    %c0_63 = arith.constant 0 : index
    %71 = vector.load %arg7[%c1_61, %c0_62, %c0_63] : memref<2x16x288xbf16, #tpu.memory_space<vmem>>, vector<1x16x288xbf16>
    %72 = vector.shape_cast %71 : vector<1x16x288xbf16> to vector<16x288xbf16>
    %cst_64 = arith.constant dense<0.000000e+00> : vector<8x288xf32>
    %73 = tpu.matmul %70, %72, %cst_64 {dimension_numbers = #tpu.dot_dimension_numbers<[1], [0], [0], [1], [0, 0, 1, 1], [], []>} : vector<8x16xbf16>, vector<16x288xbf16>, vector<8x288xf32> -> vector<8x288xf32>
    %74 = arith.truncf %73 : vector<8x288xf32> to vector<8x288xbf16>
    %c0_65 = arith.constant 0 : index
    %c0_66 = arith.constant 0 : index
    %c1_67 = arith.constant 1 : index
    %c0_68 = arith.constant 0 : index
    %c0_69 = arith.constant 0 : index
    %75 = vector.load %arg5[%c0_65, %c0_66, %c1_67, %c0_68, %c0_69] : memref<1x2x2x8x288xbf16, #tpu.memory_space<vmem>>, vector<1x1x1x8x288xbf16>
    %76 = vector.shape_cast %75 : vector<1x1x1x8x288xbf16> to vector<8x288xbf16>
    %77 = vector.shape_cast %74 : vector<8x288xbf16> to vector<1x1x1x8x288xbf16>
    tpu.vector_store %arg5[%c0_65, %c0_66, %c1_67, %c0_68, %c0_69], %77 {strides = array<i32>} : memref<1x2x2x8x288xbf16, #tpu.memory_space<vmem>>, vector<1x1x1x8x288xbf16>,
    %78 = vector.broadcast %0 : vector<1x288xf32> to vector<8x288xf32>
    %79 = arith.mulf %73, %78 : vector<8x288xf32>
    %cst_70 = arith.constant dense<0.000000e+00> : vector<8xf32>
    %80 = vector.multi_reduction <add>, %79, %cst_70 [1] : vector<8x288xf32> to vector<8xf32>
    %81 = vector.shape_cast %80 : vector<8xf32> to vector<8x1xf32>
    %82 = arith.addf %40, %81 : vector<8x1xf32>
    %83 = arith.mulf %79, %73 : vector<8x288xf32>
    %cst_71 = arith.constant dense<0.000000e+00> : vector<8xf32>
    %84 = vector.multi_reduction <add>, %83, %cst_71 [1] : vector<8x288xf32> to vector<8xf32>
    %85 = vector.shape_cast %84 : vector<8xf32> to vector<8x1xf32>
    %86 = arith.addf %44, %85 : vector<8x1xf32>
    %c0_72 = arith.constant 0 : index
    %c0_73 = arith.constant 0 : index
    %c18_74 = arith.constant 18 : index
    %87 = vector.load %arg2[%c0_72, %c0_73, %c18_74] : memref<1x4x326xf32, #tpu.memory_space<vmem>>, vector<1x4x288xf32>
    %88 = vector.shape_cast %87 : vector<1x4x288xf32> to vector<4x288xf32>
    %89 = arith.truncf %88 : vector<4x288xf32> to vector<4x288xbf16>
    %c0_75 = arith.constant 0 : index
    %c0_76 = arith.constant 0 : index
    %c0_77 = arith.constant 0 : index
    %90 = vector.load %arg7[%c0_75, %c0_76, %c0_77] : memref<2x16x288xbf16, #tpu.memory_space<vmem>>, vector<1x4x288xbf16>
    %91 = vector.shape_cast %90 : vector<1x4x288xbf16> to vector<4x288xbf16>
    %92 = vector.shape_cast %89 : vector<4x288xbf16> to vector<1x4x288xbf16>
    tpu.vector_store %arg7[%c0_75, %c0_76, %c0_77], %92 {strides = array<i32>} : memref<2x16x288xbf16, #tpu.memory_space<vmem>>, vector<1x4x288xbf16>,
    %c0_78 = arith.constant 0 : index
    %c0_79 = arith.constant 0 : index
    %c19_80 = arith.constant 19 : index
    %93 = vector.load %arg2[%c0_78, %c0_79, %c19_80] : memref<1x4x326xf32, #tpu.memory_space<vmem>>, vector<1x4x288xf32>
    %94 = vector.shape_cast %93 : vector<1x4x288xf32> to vector<4x288xf32>
    %95 = arith.truncf %94 : vector<4x288xf32> to vector<4x288xbf16>
    %c0_81 = arith.constant 0 : index
    %c4_82 = arith.constant 4 : index
    %c0_83 = arith.constant 0 : index
    %96 = vector.load %arg7[%c0_81, %c4_82, %c0_83] : memref<2x16x288xbf16, #tpu.memory_space<vmem>>, vector<1x4x288xbf16>
    %97 = vector.shape_cast %96 : vector<1x4x288xbf16> to vector<4x288xbf16>
    %98 = vector.shape_cast %95 : vector<4x288xbf16> to vector<1x4x288xbf16>
    tpu.vector_store %arg7[%c0_81, %c4_82, %c0_83], %98 {strides = array<i32>} : memref<2x16x288xbf16, #tpu.memory_space<vmem>>, vector<1x4x288xbf16>,
    %c0_84 = arith.constant 0 : index
    %c0_85 = arith.constant 0 : index
    %c36 = arith.constant 36 : index
    %99 = vector.load %arg2[%c0_84, %c0_85, %c36] : memref<1x4x326xf32, #tpu.memory_space<vmem>>, vector<1x4x288xf32>
    %100 = vector.shape_cast %99 : vector<1x4x288xf32> to vector<4x288xf32>
    %101 = arith.truncf %100 : vector<4x288xf32> to vector<4x288xbf16>
    %c0_86 = arith.constant 0 : index
    %c8_87 = arith.constant 8 : index
    %c0_88 = arith.constant 0 : index
    %102 = vector.load %arg7[%c0_86, %c8_87, %c0_88] : memref<2x16x288xbf16, #tpu.memory_space<vmem>>, vector<1x4x288xbf16>
    %103 = vector.shape_cast %102 : vector<1x4x288xbf16> to vector<4x288xbf16>
    %104 = vector.shape_cast %101 : vector<4x288xbf16> to vector<1x4x288xbf16>
    tpu.vector_store %arg7[%c0_86, %c8_87, %c0_88], %104 {strides = array<i32>} : memref<2x16x288xbf16, #tpu.memory_space<vmem>>, vector<1x4x288xbf16>,
    %c0_89 = arith.constant 0 : index
    %c0_90 = arith.constant 0 : index
    %c37 = arith.constant 37 : index
    %105 = vector.load %arg2[%c0_89, %c0_90, %c37] : memref<1x4x326xf32, #tpu.memory_space<vmem>>, vector<1x4x288xf32>
    %106 = vector.shape_cast %105 : vector<1x4x288xf32> to vector<4x288xf32>
    %107 = arith.truncf %106 : vector<4x288xf32> to vector<4x288xbf16>
    %c0_91 = arith.constant 0 : index
    %c12_92 = arith.constant 12 : index
    %c0_93 = arith.constant 0 : index
    %108 = vector.load %arg7[%c0_91, %c12_92, %c0_93] : memref<2x16x288xbf16, #tpu.memory_space<vmem>>, vector<1x4x288xbf16>
    %109 = vector.shape_cast %108 : vector<1x4x288xbf16> to vector<4x288xbf16>
    %110 = vector.shape_cast %107 : vector<4x288xbf16> to vector<1x4x288xbf16>
    tpu.vector_store %arg7[%c0_91, %c12_92, %c0_93], %110 {strides = array<i32>} : memref<2x16x288xbf16, #tpu.memory_space<vmem>>, vector<1x4x288xbf16>,
    %c1_94 = arith.constant 1 : index
    %c0_95 = arith.constant 0 : index
    %c0_96 = arith.constant 0 : index
    %c0_97 = arith.constant 0 : index
    %111 = vector.load %arg3[%c1_94, %c0_95, %c0_96, %c0_97] : memref<2x2x8x16xbf16, #tpu.memory_space<vmem>>, vector<1x1x8x16xbf16>
    %112 = vector.shape_cast %111 : vector<1x1x8x16xbf16> to vector<8x16xbf16>
    %c0_98 = arith.constant 0 : index
    %c0_99 = arith.constant 0 : index
    %c0_100 = arith.constant 0 : index
    %113 = vector.load %arg7[%c0_98, %c0_99, %c0_100] : memref<2x16x288xbf16, #tpu.memory_space<vmem>>, vector<1x16x288xbf16>
    %114 = vector.shape_cast %113 : vector<1x16x288xbf16> to vector<16x288xbf16>
    %cst_101 = arith.constant dense<0.000000e+00> : vector<8x288xf32>
    %115 = tpu.matmul %112, %114, %cst_101 {dimension_numbers = #tpu.dot_dimension_numbers<[1], [0], [0], [1], [0, 0, 1, 1], [], []>} : vector<8x16xbf16>, vector<16x288xbf16>, vector<8x288xf32> -> vector<8x288xf32>
    %116 = arith.truncf %115 : vector<8x288xf32> to vector<8x288xbf16>
    %c0_102 = arith.constant 0 : index
    %c1_103 = arith.constant 1 : index
    %c0_104 = arith.constant 0 : index
    %c0_105 = arith.constant 0 : index
    %c0_106 = arith.constant 0 : index
    %117 = vector.load %arg5[%c0_102, %c1_103, %c0_104, %c0_105, %c0_106] : memref<1x2x2x8x288xbf16, #tpu.memory_space<vmem>>, vector<1x1x1x8x288xbf16>
    %118 = vector.shape_cast %117 : vector<1x1x1x8x288xbf16> to vector<8x288xbf16>
    %119 = vector.shape_cast %116 : vector<8x288xbf16> to vector<1x1x1x8x288xbf16>
    tpu.vector_store %arg5[%c0_102, %c1_103, %c0_104, %c0_105, %c0_106], %119 {strides = array<i32>} : memref<1x2x2x8x288xbf16, #tpu.memory_space<vmem>>, vector<1x1x1x8x288xbf16>,
    %120 = vector.broadcast %0 : vector<1x288xf32> to vector<8x288xf32>
    %121 = arith.mulf %115, %120 : vector<8x288xf32>
    %cst_107 = arith.constant dense<0.000000e+00> : vector<8xf32>
    %122 = vector.multi_reduction <add>, %121, %cst_107 [1] : vector<8x288xf32> to vector<8xf32>
    %123 = vector.shape_cast %122 : vector<8xf32> to vector<8x1xf32>
    %124 = arith.addf %82, %123 : vector<8x1xf32>
    %125 = arith.mulf %121, %115 : vector<8x288xf32>
    %cst_108 = arith.constant dense<0.000000e+00> : vector<8xf32>
    %126 = vector.multi_reduction <add>, %125, %cst_108 [1] : vector<8x288xf32> to vector<8xf32>
    %127 = vector.shape_cast %126 : vector<8xf32> to vector<8x1xf32>
    %128 = arith.addf %86, %127 : vector<8x1xf32>
    %c0_109 = arith.constant 0 : index
    %c0_110 = arith.constant 0 : index
    %c19_111 = arith.constant 19 : index
    %129 = vector.load %arg2[%c0_109, %c0_110, %c19_111] : memref<1x4x326xf32, #tpu.memory_space<vmem>>, vector<1x4x288xf32>
    %130 = vector.shape_cast %129 : vector<1x4x288xf32> to vector<4x288xf32>
    %131 = arith.truncf %130 : vector<4x288xf32> to vector<4x288xbf16>
    %c1_112 = arith.constant 1 : index
    %c0_113 = arith.constant 0 : index
    %c0_114 = arith.constant 0 : index
    %132 = vector.load %arg7[%c1_112, %c0_113, %c0_114] : memref<2x16x288xbf16, #tpu.memory_space<vmem>>, vector<1x4x288xbf16>
    %133 = vector.shape_cast %132 : vector<1x4x288xbf16> to vector<4x288xbf16>
    %134 = vector.shape_cast %131 : vector<4x288xbf16> to vector<1x4x288xbf16>
    tpu.vector_store %arg7[%c1_112, %c0_113, %c0_114], %134 {strides = array<i32>} : memref<2x16x288xbf16, #tpu.memory_space<vmem>>, vector<1x4x288xbf16>,
    %c0_115 = arith.constant 0 : index
    %c0_116 = arith.constant 0 : index
    %c20_117 = arith.constant 20 : index
    %135 = vector.load %arg2[%c0_115, %c0_116, %c20_117] : memref<1x4x326xf32, #tpu.memory_space<vmem>>, vector<1x4x288xf32>
    %136 = vector.shape_cast %135 : vector<1x4x288xf32> to vector<4x288xf32>
    %137 = arith.truncf %136 : vector<4x288xf32> to vector<4x288xbf16>
    %c1_118 = arith.constant 1 : index
    %c4_119 = arith.constant 4 : index
    %c0_120 = arith.constant 0 : index
    %138 = vector.load %arg7[%c1_118, %c4_119, %c0_120] : memref<2x16x288xbf16, #tpu.memory_space<vmem>>, vector<1x4x288xbf16>
    %139 = vector.shape_cast %138 : vector<1x4x288xbf16> to vector<4x288xbf16>
    %140 = vector.shape_cast %137 : vector<4x288xbf16> to vector<1x4x288xbf16>
    tpu.vector_store %arg7[%c1_118, %c4_119, %c0_120], %140 {strides = array<i32>} : memref<2x16x288xbf16, #tpu.memory_space<vmem>>, vector<1x4x288xbf16>,
    %c0_121 = arith.constant 0 : index
    %c0_122 = arith.constant 0 : index
    %c37_123 = arith.constant 37 : index
    %141 = vector.load %arg2[%c0_121, %c0_122, %c37_123] : memref<1x4x326xf32, #tpu.memory_space<vmem>>, vector<1x4x288xf32>
    %142 = vector.shape_cast %141 : vector<1x4x288xf32> to vector<4x288xf32>
    %143 = arith.truncf %142 : vector<4x288xf32> to vector<4x288xbf16>
    %c1_124 = arith.constant 1 : index
    %c8_125 = arith.constant 8 : index
    %c0_126 = arith.constant 0 : index
    %144 = vector.load %arg7[%c1_124, %c8_125, %c0_126] : memref<2x16x288xbf16, #tpu.memory_space<vmem>>, vector<1x4x288xbf16>
    %145 = vector.shape_cast %144 : vector<1x4x288xbf16> to vector<4x288xbf16>
    %146 = vector.shape_cast %143 : vector<4x288xbf16> to vector<1x4x288xbf16>
    tpu.vector_store %arg7[%c1_124, %c8_125, %c0_126], %146 {strides = array<i32>} : memref<2x16x288xbf16, #tpu.memory_space<vmem>>, vector<1x4x288xbf16>,
    %c0_127 = arith.constant 0 : index
    %c0_128 = arith.constant 0 : index
    %c38 = arith.constant 38 : index
    %147 = vector.load %arg2[%c0_127, %c0_128, %c38] : memref<1x4x326xf32, #tpu.memory_space<vmem>>, vector<1x4x288xf32>
    %148 = vector.shape_cast %147 : vector<1x4x288xf32> to vector<4x288xf32>
    %149 = arith.truncf %148 : vector<4x288xf32> to vector<4x288xbf16>
    %c1_129 = arith.constant 1 : index
    %c12_130 = arith.constant 12 : index
    %c0_131 = arith.constant 0 : index
    %150 = vector.load %arg7[%c1_129, %c12_130, %c0_131] : memref<2x16x288xbf16, #tpu.memory_space<vmem>>, vector<1x4x288xbf16>
    %151 = vector.shape_cast %150 : vector<1x4x288xbf16> to vector<4x288xbf16>
    %152 = vector.shape_cast %149 : vector<4x288xbf16> to vector<1x4x288xbf16>
    tpu.vector_store %arg7[%c1_129, %c12_130, %c0_131], %152 {strides = array<i32>} : memref<2x16x288xbf16, #tpu.memory_space<vmem>>, vector<1x4x288xbf16>,
    %c1_132 = arith.constant 1 : index
    %c1_133 = arith.constant 1 : index
    %c0_134 = arith.constant 0 : index
    %c0_135 = arith.constant 0 : index
    %153 = vector.load %arg3[%c1_132, %c1_133, %c0_134, %c0_135] : memref<2x2x8x16xbf16, #tpu.memory_space<vmem>>, vector<1x1x8x16xbf16>
    %154 = vector.shape_cast %153 : vector<1x1x8x16xbf16> to vector<8x16xbf16>
    %c1_136 = arith.constant 1 : index
    %c0_137 = arith.constant 0 : index
    %c0_138 = arith.constant 0 : index
    %155 = vector.load %arg7[%c1_136, %c0_137, %c0_138] : memref<2x16x288xbf16, #tpu.memory_space<vmem>>, vector<1x16x288xbf16>
    %156 = vector.shape_cast %155 : vector<1x16x288xbf16> to vector<16x288xbf16>
    %cst_139 = arith.constant dense<0.000000e+00> : vector<8x288xf32>
    %157 = tpu.matmul %154, %156, %cst_139 {dimension_numbers = #tpu.dot_dimension_numbers<[1], [0], [0], [1], [0, 0, 1, 1], [], []>} : vector<8x16xbf16>, vector<16x288xbf16>, vector<8x288xf32> -> vector<8x288xf32>
    %158 = arith.truncf %157 : vector<8x288xf32> to vector<8x288xbf16>
    %c0_140 = arith.constant 0 : index
    %c1_141 = arith.constant 1 : index
    %c1_142 = arith.constant 1 : index
    %c0_143 = arith.constant 0 : index
    %c0_144 = arith.constant 0 : index
    %159 = vector.load %arg5[%c0_140, %c1_141, %c1_142, %c0_143, %c0_144] : memref<1x2x2x8x288xbf16, #tpu.memory_space<vmem>>, vector<1x1x1x8x288xbf16>
    %160 = vector.shape_cast %159 : vector<1x1x1x8x288xbf16> to vector<8x288xbf16>
    %161 = vector.shape_cast %158 : vector<8x288xbf16> to vector<1x1x1x8x288xbf16>
    tpu.vector_store %arg5[%c0_140, %c1_141, %c1_142, %c0_143, %c0_144], %161 {strides = array<i32>} : memref<1x2x2x8x288xbf16, #tpu.memory_space<vmem>>, vector<1x1x1x8x288xbf16>,
    %162 = vector.broadcast %0 : vector<1x288xf32> to vector<8x288xf32>
    %163 = arith.mulf %157, %162 : vector<8x288xf32>
    %cst_145 = arith.constant dense<0.000000e+00> : vector<8xf32>
    %164 = vector.multi_reduction <add>, %163, %cst_145 [1] : vector<8x288xf32> to vector<8xf32>
    %165 = vector.shape_cast %164 : vector<8xf32> to vector<8x1xf32>
    %166 = arith.addf %124, %165 : vector<8x1xf32>
    %167 = arith.mulf %163, %157 : vector<8x288xf32>
    %cst_146 = arith.constant dense<0.000000e+00> : vector<8xf32>
    %168 = vector.multi_reduction <add>, %167, %cst_146 [1] : vector<8x288xf32> to vector<8xf32>
    %169 = vector.shape_cast %168 : vector<8xf32> to vector<8x1xf32>
    %170 = arith.addf %128, %169 : vector<8x1xf32>
    %c0_147 = arith.constant 0 : index
    %c0_148 = arith.constant 0 : index
    %c0_149 = arith.constant 0 : index
    %c0_150 = arith.constant 0 : index
    %171 = vector.load %arg6[%c0_147, %c0_148, %c0_149, %c0_150] : memref<1x2x8x1xf32, #tpu.memory_space<vmem>>, vector<1x1x8x1xf32>
    %172 = vector.shape_cast %171 : vector<1x1x8x1xf32> to vector<8x1xf32>
    %173 = vector.shape_cast %166 : vector<8x1xf32> to vector<1x1x8x1xf32>
    tpu.vector_store %arg6[%c0_147, %c0_148, %c0_149, %c0_150], %173 {strides = array<i32>} : memref<1x2x8x1xf32, #tpu.memory_space<vmem>>, vector<1x1x8x1xf32>,
    %c0_151 = arith.constant 0 : index
    %c1_152 = arith.constant 1 : index
    %c0_153 = arith.constant 0 : index
    %c0_154 = arith.constant 0 : index
    %174 = vector.load %arg6[%c0_151, %c1_152, %c0_153, %c0_154] : memref<1x2x8x1xf32, #tpu.memory_space<vmem>>, vector<1x1x8x1xf32>
    %175 = vector.shape_cast %174 : vector<1x1x8x1xf32> to vector<8x1xf32>
    %176 = vector.shape_cast %170 : vector<8x1xf32> to vector<1x1x8x1xf32>
    tpu.vector_store %arg6[%c0_151, %c1_152, %c0_153, %c0_154], %176 {strides = array<i32>} : memref<1x2x8x1xf32, #tpu.memory_space<vmem>>, vector<1x1x8x1xf32>,
    return
  }
  func.func @transform_0(%arg0: i32, %arg1: i32) -> (i32, i32, i32) {
    %c0_i32 = arith.constant 0 : i32
    %c0_i32_0 = arith.constant 0 : i32
    %c0_i32_1 = arith.constant 0 : i32
    return %arg0, %c0_i32, %c0_i32_0 : i32, i32, i32
  }
  func.func @transform_1(%arg0: i32, %arg1: i32) -> (i32, i32, i32, i32) {
    %c0_i32 = arith.constant 0 : i32
    %c0_i32_0 = arith.constant 0 : i32
    %c0_i32_1 = arith.constant 0 : i32
    %c0_i32_2 = arith.constant 0 : i32
    return %c0_i32, %c0_i32_0, %arg1, %c0_i32_1 : i32, i32, i32, i32
  }
  func.func @transform_2(%arg0: i32, %arg1: i32) -> (i32, i32) {
    %c0_i32 = arith.constant 0 : i32
    %c0_i32_0 = arith.constant 0 : i32
    %c0_i32_1 = arith.constant 0 : i32
    return %c0_i32, %c0_i32_0 : i32, i32
  }
  func.func @transform_3(%arg0: i32, %arg1: i32) -> (i32, i32, i32, i32, i32) {
    %c0_i32 = arith.constant 0 : i32
    %c0_i32_0 = arith.constant 0 : i32
    %c0_i32_1 = arith.constant 0 : i32
    %c0_i32_2 = arith.constant 0 : i32
    return %arg0, %c0_i32, %c0_i32_0, %arg1, %c0_i32_1 : i32, i32, i32, i32, i32
  }
  func.func @transform_4(%arg0: i32, %arg1: i32) -> (i32, i32, i32, i32) {
    %c0_i32 = arith.constant 0 : i32
    %c0_i32_0 = arith.constant 0 : i32
    %c0_i32_1 = arith.constant 0 : i32
    return %arg0, %c0_i32, %arg1, %c0_i32_0 : i32, i32, i32, i32
  }
}

</mosaic_0001>

<llo_original>
// kernel: tpu_custom_call.1
$region0: #{tpu_custom_call.1}
  #allocation0 [shape = 'u32[]', space=smem, size = 0x4, offset = 0x4, fixed_abs, tag = 'smem constant byte address 0x4 - core index']
  #allocation1 [shape = 'u32[144,128]{1,0:T(1,128)}', space=vmem, size = 0x12000, scoped, tag = 'internal scratch']
  #allocation2 [shape = 'bf16[2,16,288]{2,1,0:T(8,128)(2,1)}', space=vmem, size = 0x6000, scoped, tag = 'scratch operand']
  %s0 = inlined_call_operand.hbm [shape: f32[2,4,326], index: 0, kind: input, shape index: {}]
  %s1 = inlined_call_operand.hbm [shape: bf16[2,2,8,16], index: 1, kind: input, shape index: {}]
  %s2 = inlined_call_operand.vmem [shape: f32[1,288], index: 2, kind: input, shape index: {}]
  %s3 = inlined_call_operand.hbm [shape: bf16[2,2,2,8,288], index: 3, kind: output, shape index: {0}]
  %s4 = inlined_call_operand.vmem [shape: f32[2,2,8,1], index: 4, kind: output, shape index: {1}]
  %5 = xla_tuple %s3, %s4
  %s6 = sld [smem:[#allocation0]]
  $region61: #{tpu_custom_call.1} parent=0
    _
  %s8 = ssub.s32 1, %s6
  %s9 = scalar_select 0, %s8, %s6
  $region1: #{tpu_custom_call.1} parent=0
    #allocation3 [shape = 'u8[12288]{0}', space=vmem, size = 0x3000, scoped, tag = 'input window, operand 0']
    #allocation4 [shape = 's32[2]{0}', space=sflag, size = 0x8, scoped, tag = 'scoped memory for tpu_custom_call.1']
    #allocation5 [shape = 's32[2]{0}', space=sflag, size = 0x8, scoped, tag = 'scoped memory for tpu_custom_call.1']
    #allocation6 [shape = 'u8[8192]{0}', space=vmem, size = 0x2000, scoped, tag = 'input window, operand 1, single buffered']
    #allocation7 [shape = 's32[1]{0}', space=sflag, size = 0x4, scoped, tag = 'scoped memory for tpu_custom_call.1']
    #allocation8 [shape = 'u8[49152]{0}', space=vmem, size = 0xc000, scoped, tag = 'output window, operand 0']
    %10 = vsyncpa [#allocation4], 0
    %s11 = scalar_lea.sflag [#allocation4], 1
    %12 = vsyncpa %s11, 0
    %13 = vsyncpa [#allocation7], 0
    %14 = vsyncpa [#allocation5], 0
    %s15 = scalar_lea.sflag [#allocation5], 1
    %16 = vsyncpa %s15, 0
    loop: start=0, step=1, limit=4
    $region2: #{tpu_custom_call.1} parent=1 // loop_pre_header
      _
    $region3: #{tpu_custom_call.1} parent=1 // loop_header
      %s18 = sphi 0, %s22
      %p19 = scmp.ge.s32.totalorder %s18, 4
      %s25 = sphi 0, %s37
      %s26 = sphi 0, %s33
      %s27 = sphi 0, %s25
      %s28 = sphi 0, %s26
      %s29 = sphi 0, %s27
      %s30 = sphi 0, %s28
      %s40 = sphi 0, %s42
      %s43 = sphi 0, %s40
      %s44 = sphi 0, %s43
      %s60 = sphi 0, %s44
      %s66 = sphi 0, %s68
      %s69 = sphi 0, %s66
      %s70 = sphi 0, %s69
      %s86 = sphi 0, %s70
      %s90 = sphi 0, %s90
      %s92 = sphi 0, %s90
      %s93 = sphi 0, %s92
      %s107 = sphi 0, %s93
      %s115 = sphi 0, %s117
      %s118 = sphi 0, %s115
      %s119 = sphi 0, %s118
      %s135 = sphi 0, %s119
      %s143 = sphi 0, %s145
      %s146 = sphi 0, %s143
      %s147 = sphi 0, %s146
      %s163 = sphi 0, %s147
    $region4: #{tpu_custom_call.1} parent=1 // loop_header_branch
      %21 = sbr.rel (%p19) target = $region8
    $region5: #{tpu_custom_call.1} parent=1 // loop_body
      %s23 = ssub.s32 %s18, 1
      %s24 = ssub.s32 %s18, 2
      %s31 = sadd.s32 1, %s26
      %p32 = scmp.ge.s32.totalorder %s31, 1
      %s33 = scalar_select %p32, 0, %s31
      %s34 = sadd.s32 1, %s25
      %s35 = scalar_select %p32, %s34, %s25
      %p36 = scmp.ge.s32.totalorder %s35, 2
      %s37 = scalar_select %p36, 0, %s35
      %s38 = ssub.s32 %s25, %s37
      %p39 = scmp.eq.s32.totalorder %s38, 0
      %s41 = sadd.s32 %s40, 1
      %s42 = scalar_select %p39, %s40, %s41
      %p45 = pneg %p39
      %p46 = scmp.eq.s32.totalorder %s18, 1
      %p47 = por %p45, %p46
      %p48 = scmp.ne.s32.totalorder %s40, %s43
      %p49 = scmp.eq.s32.totalorder %s18, 0
      %p50 = por %p48, %p49
      %p51 = scmp.ne.s32.totalorder %s40, %s43
      %p52 = scmp.eq.s32.totalorder %s23, 1
      %p53 = por %p51, %p52
      %p54 = scmp.ne.s32.totalorder %s43, %s44
      %p55 = scmp.eq.s32.totalorder %s23, 0
      %p56 = por %p54, %p55
      %p57 = scmp.ne.s32.totalorder %s43, %s44
      %p58 = scmp.eq.s32.totalorder %s24, 1
      %p59 = por %p57, %p58
      %p61 = scmp.ne.s32.totalorder %s44, %s60
      %p62 = scmp.eq.s32.totalorder %s24, 0
      %p63 = por %p61, %p62
      %s64 = ssub.s32 %s26, %s33
      %p65 = scmp.eq.s32.totalorder %s64, 0
      %s67 = sadd.s32 %s66, 1
      %s68 = scalar_select %p65, %s66, %s67
      %p71 = pneg %p65
      %p72 = scmp.eq.s32.totalorder %s18, 1
      %p73 = por %p71, %p72
      %p74 = scmp.ne.s32.totalorder %s66, %s69
      %p75 = scmp.eq.s32.totalorder %s18, 0
      %p76 = por %p74, %p75
      %p77 = scmp.ne.s32.totalorder %s66, %s69
      %p78 = scmp.eq.s32.totalorder %s23, 1
      %p79 = por %p77, %p78
      %p80 = scmp.ne.s32.totalorder %s69, %s70
      %p81 = scmp.eq.s32.totalorder %s23, 0
      %p82 = por %p80, %p81
      %p83 = scmp.ne.s32.totalorder %s69, %s70
      %p84 = scmp.eq.s32.totalorder %s24, 1
      %p85 = por %p83, %p84
      %p87 = scmp.ne.s32.totalorder %s70, %s86
      %p88 = scmp.eq.s32.totalorder %s24, 0
      %p89 = por %p87, %p88
      %s91 = sadd.s32 %s90, 1
      %p94 = scmp.eq.s32.totalorder %s18, 1
      %p95 = scmp.ne.s32.totalorder %s90, %s92
      %p96 = scmp.eq.s32.totalorder %s18, 0
      %p97 = por %p95, %p96
      %p98 = scmp.ne.s32.totalorder %s90, %s92
      %p99 = scmp.eq.s32.totalorder %s23, 1
      %p100 = por %p98, %p99
      %p101 = scmp.ne.s32.totalorder %s92, %s93
      %p102 = scmp.eq.s32.totalorder %s23, 0
      %p103 = por %p101, %p102
      %p104 = scmp.ne.s32.totalorder %s92, %s93
      %p105 = scmp.eq.s32.totalorder %s24, 1
      %p106 = por %p104, %p105
      %p108 = scmp.ne.s32.totalorder %s93, %s107
      %p109 = scmp.eq.s32.totalorder %s24, 0
      %p110 = por %p108, %p109
      %s111 = ssub.s32 %s25, %s37
      %s112 = ssub.s32 %s26, %s33
      %s113 = sor.u32 %s111, %s112
      %p114 = scmp.eq.s32.totalorder %s113, 0
      %s116 = sadd.s32 %s115, 1
      %s117 = scalar_select %p114, %s115, %s116
      %p120 = pneg %p114
      %p121 = scmp.eq.s32.totalorder %s18, 1
      %p122 = por %p120, %p121
      %p123 = scmp.ne.s32.totalorder %s115, %s118
      %p124 = scmp.eq.s32.totalorder %s18, 0
      %p125 = por %p123, %p124
      %p126 = scmp.ne.s32.totalorder %s115, %s118
      %p127 = scmp.eq.s32.totalorder %s23, 1
      %p128 = por %p126, %p127
      %p129 = scmp.ne.s32.totalorder %s118, %s119
      %p130 = scmp.eq.s32.totalorder %s23, 0
      %p131 = por %p129, %p130
      %p132 = scmp.ne.s32.totalorder %s118, %s119
      %p133 = scmp.eq.s32.totalorder %s24, 1
      %p134 = por %p132, %p133
      %p136 = scmp.ne.s32.totalorder %s119, %s135
      %p137 = scmp.eq.s32.totalorder %s24, 0
      %p138 = por %p136, %p137
      %s139 = ssub.s32 %s25, %s37
      %s140 = ssub.s32 %s26, %s33
      %s141 = sor.u32 %s139, %s140
      %p142 = scmp.eq.s32.totalorder %s141, 0
      %s144 = sadd.s32 %s143, 1
      %s145 = scalar_select %p142, %s143, %s144
      %p148 = pneg %p142
      %p149 = scmp.eq.s32.totalorder %s18, 1
      %p150 = por %p148, %p149
      %p151 = scmp.ne.s32.totalorder %s143, %s146
      %p152 = scmp.eq.s32.totalorder %s18, 0
      %p153 = por %p151, %p152
      %p154 = scmp.ne.s32.totalorder %s143, %s146
      %p155 = scmp.eq.s32.totalorder %s23, 1
      %p156 = por %p154, %p155
      %p157 = scmp.ne.s32.totalorder %s146, %s147
      %p158 = scmp.eq.s32.totalorder %s23, 0
      %p159 = por %p157, %p158
      %p160 = scmp.ne.s32.totalorder %s146, %s147
      %p161 = scmp.eq.s32.totalorder %s24, 1
      %p162 = por %p160, %p161
      %p164 = scmp.ne.s32.totalorder %s147, %s163
      %p165 = scmp.eq.s32.totalorder %s24, 0
      %p166 = por %p164, %p165
      %p167 = scmp.le.s32.totalorder 1, %s18
      %p168 = scmp.lt.s32.totalorder %s18, 3
      %p169 = pnand %p167, %p168
      %p170 = pneg %p169
      // Predicated region
      $region9: #{tpu_custom_call.1} parent=5 // pred_check
        _
      $region10: #{tpu_custom_call.1} parent=5 // pred_check_branch
        %172 = sbr.rel (%p169) target = $region12
      $region11: #{tpu_custom_call.1} parent=5 // pred_region
        %s173 = ssub.s32 %s18, 1
        // Predicated region
        $region13: #{tpu_custom_call.1} parent=11 // pred_check
          %p174 = pneg %p82
        $region14: #{tpu_custom_call.1} parent=11 // pred_check_branch
          %176 = sbr.rel (%p174) target = $region16
        $region15: #{tpu_custom_call.1} parent=11 // pred_region
          %s178 = ssub.s32 256, 256
          %179 = vsyncadd [#allocation7], %s178
          %s180 = smul.addr %s28, 64
          %s181 = scalar_lea.hbm %s1, %s180
          %s182 = sshll.u32 [#allocation6], 4
          %s183 = int_to_ptr.vmem [resolvable:$true] %s182
          %188 = dma.hbm_to_vmem [thread:$0]  %s181, 256, %s183, [#allocation7], 64, 64, 4
        $region16: #{tpu_custom_call.1} parent=11 // pred_fallthru
          _
        // Predicated region
        $region17: #{tpu_custom_call.1} parent=11 // pred_check
          %p189 = pneg %p103
        $region18: #{tpu_custom_call.1} parent=11 // pred_check_branch
          %191 = sbr.rel (%p189) target = $region20
        $region19: #{tpu_custom_call.1} parent=11 // pred_region
          _
        $region20: #{tpu_custom_call.1} parent=11 // pred_fallthru
          _
      $region12: #{tpu_custom_call.1} parent=5 // pred_fallthru
        _
      %p192 = scmp.lt.s32.totalorder %s18, 2
      // Predicated region
      $region21: #{tpu_custom_call.1} parent=5 // pred_check
        %p193 = pneg %p192
      $region22: #{tpu_custom_call.1} parent=5 // pred_check_branch
        %195 = sbr.rel (%p193) target = $region24
      $region23: #{tpu_custom_call.1} parent=5 // pred_region
        // Predicated region
        $region25: #{tpu_custom_call.1} parent=23 // pred_check
          %p196 = pneg %p50
        $region26: #{tpu_custom_call.1} parent=23 // pred_check_branch
          %198 = sbr.rel (%p196) target = $region28
        $region27: #{tpu_custom_call.1} parent=23 // pred_region
          %s199 = sand.u32 %s40, 1
          %s200 = scalar_lea.sflag [#allocation4], %s199
          %s201 = sand.u32 %s40, 1
          %s202 = smul.addr %s201, 12
          %s203 = scalar_lea.vmem [#allocation3], %s202
          %s205 = ssub.s32 192, 192
          %206 = vsyncadd %s200, %s205
          %s207 = smul.addr %s25, 3
          %s208 = smul.addr %s207, 64
          %s209 = scalar_lea.hbm %s0, %s208
          %s211 = sshll.u32 %s203, 4
          %s212 = int_to_ptr.vmem [resolvable:$true] %s211
          %214 = dma.hbm_to_vmem [thread:$0]  %s209, 192, %s212, %s200
        $region28: #{tpu_custom_call.1} parent=23 // pred_fallthru
          _
      $region24: #{tpu_custom_call.1} parent=5 // pred_fallthru
        _
      %p215 = scmp.le.s32.totalorder 1, %s18
      %p216 = scmp.lt.s32.totalorder %s18, 3
      %p217 = pnand %p215, %p216
      %p218 = pneg %p217
      // Predicated region
      $region29: #{tpu_custom_call.1} parent=5 // pred_check
        _
      $region30: #{tpu_custom_call.1} parent=5 // pred_check_branch
        %220 = sbr.rel (%p217) target = $region32
      $region31: #{tpu_custom_call.1} parent=5 // pred_region
        %s221 = ssub.s32 %s18, 1
        %s222 = sand.u32 %s43, 1
        %s223 = scalar_lea.sflag [#allocation4], %s222
        %s224 = sand.u32 %s43, 1
        %s225 = smul.addr %s224, 12
        %s226 = scalar_lea.vmem [#allocation3], %s225
        // Predicated region
        $region33: #{tpu_custom_call.1} parent=31 // pred_check
          %p227 = pneg %p56
        $region34: #{tpu_custom_call.1} parent=31 // pred_check_branch
          %229 = sbr.rel (%p227) target = $region36
        $region35: #{tpu_custom_call.1} parent=31 // pred_region
          %230 = dma.done %s223, 192
        $region36: #{tpu_custom_call.1} parent=31 // pred_fallthru
          _
        // Predicated region
        $region37: #{tpu_custom_call.1} parent=31 // pred_check
          %p231 = pneg %p82
        $region38: #{tpu_custom_call.1} parent=31 // pred_check_branch
          %233 = sbr.rel (%p231) target = $region40
        $region39: #{tpu_custom_call.1} parent=31 // pred_region
          %234 = dma.done [#allocation7], 256
        $region40: #{tpu_custom_call.1} parent=31 // pred_fallthru
          _
        %s235 = sand.u32 %s43, 1
        %s236 = scalar_lea.sflag [#allocation4], %s235
        %s237 = sand.u32 %s43, 1
        %s238 = smul.addr %s237, 12
        %s239 = scalar_lea.vmem [#allocation3], %s238
        %p240 = pneg %p56
        %p241 = pneg %p53
        %p242 = pneg %p82
        %p243 = pneg %p79
        %p244 = pneg %p103
        %p245 = pneg %p100
        %p246 = pneg %p131
        %p247 = pneg %p128
        %s248 = sand.u32 %s118, 1
        %s249 = scalar_lea.sflag [#allocation5], %s248
        %s250 = sand.u32 %s118, 1
        %s251 = smul.addr %s250, 48
        %s252 = scalar_lea.vmem [#allocation8], %s251
        %p253 = pneg %p159
        %p254 = pneg %p156
        %p255 = scmp.lt.s32.totalorder %s27, 1
        %s256 = scalar_select %p255, %s27, 1
        %p257 = scmp.lt.s32.totalorder %s28, 0
        %s258 = scalar_select %p257, %s28, 0
        %s259 = smul.addr %s256, 2
        %s260 = sadd.s32 %s258, %s259
        %s261 = smul.addr %s260, 8
        %s262 = scalar_lea.vmem %s4, %s261
        %p263 = scmp.lt.s32.totalorder %s27, 1
        %s264 = scalar_select %p263, %s27, 1
        %p265 = scmp.lt.s32.totalorder %s28, 0
        %s266 = scalar_select %p265, %s28, 0
        %s267 = smul.addr %s264, 2
        %s268 = sadd.s32 %s266, %s267
        %s269 = smul.addr %s268, 8
        %s270 = scalar_lea.vmem %s4, %s269
        %v272 = vld [vmem:[%s2] sm:$0x7]
        %v273 = vld [vmem:[%s226] sm:$0xff]
        %v274 = vld [vmem:[%s226 + $0x8] sm:$0xf]
        %v276 = vcombine.high %v273, %v273
        %v278 = vpack.c.bf16 %v273, %v273
        %v279 = vpack.c.bf16 %v276, %v276
        %v280 = vpack.c.bf16 %v274, %v274
        %v284 = vunpack.c.l.b16 %v278
        %v285 = vunpack.c.l.b16 %v279
        %v286 = vunpack.c.l.b16 %v280
        %v287 = vpack.c.b16 %v285, %v284
        %v288 = vpack.c.b16 %v286, %v286
        %291 = vst [vmem:[#allocation2] sm:$0x33] %v287
        %vm292 = vcmask 254976
        %293 = vst.msk [vmem:[#allocation2 + $0x8] sm:$0x3] %vm292, %v288
        %v294 = vld [vmem:[%s226] sm:$0xff]
        %v295 = vld [vmem:[%s226 + $0x8] sm:$0xf]
        %v297 = vcombine.high %v294, %v294
        %v299 = vpack.c.bf16 %v294, %v294
        %v300 = vpack.c.bf16 %v297, %v297
        %v301 = vpack.c.bf16 %v295, %v295
        %v305 = vunpack.c.l.b16 %v299
        %v306 = vunpack.c.l.b16 %v300
        %v307 = vunpack.c.l.b16 %v301
        %v308 = vpack.c.b16 %v306, %v305
        %v309 = vpack.c.b16 %v307, %v307
        %v310 = vrot.slane %v308, 6
        %v311 = vrot.slane %v309, 6
        %312 = vrot.lane.b32.xlu0 %v310, 127
        %v313 = vpop.permute.xlu0 %312
        %314 = vrot.lane.b32.xlu0 %v311, 127
        %v315 = vpop.permute.xlu0 %314
        %v316 = vrot.slane %v313, 4
        %v317 = vrot.slane %v315, 4
        %vm318 = vcmask 1043456
        %v319 = vsel %vm318, %v316, %v317
        %vm320 = vcmask 1039360
        %v321 = vsel %vm320, %v313, %v319
        %324 = vst [vmem:[#allocation2] sm:$0xcc] %v321
        %vm325 = vcmask 257026
        %326 = vst.msk [vmem:[#allocation2 + $0x8] sm:$0xc] %vm325, %v315
        %v327 = vld [vmem:[%s226] sm:$0xff]
        %v328 = vld [vmem:[%s226 + $0x8] sm:$0xf]
        %v330 = vcombine.high %v327, %v327
        %v332 = vpack.c.bf16 %v327, %v327
        %v333 = vpack.c.bf16 %v330, %v330
        %v334 = vpack.c.bf16 %v328, %v328
        %v338 = vunpack.c.l.b16 %v332
        %v339 = vunpack.c.l.b16 %v333
        %v340 = vunpack.c.l.b16 %v334
        %v341 = vpack.c.b16 %v339, %v338
        %v342 = vpack.c.b16 %v340, %v340
        %343 = vrot.lane.b32.xlu0 %v341, 110
        %v344 = vpop.permute.xlu0 %343
        %345 = vrot.lane.b32.xlu0 %v342, 110
        %v346 = vpop.permute.xlu0 %345
        %v347 = vrot.slane %v344, 4
        %v348 = vrot.slane %v346, 4
        %v349 = vsel %vm318, %v347, %v348
        %vm350 = vcmask 900096
        %v351 = vsel %vm350, %v344, %v349
        %354 = vst [vmem:[#allocation2 + $0xc] sm:$0x33] %v351
        %355 = vst.msk [vmem:[#allocation2 + $0x14] sm:$0x3] %vm292, %v346
        %v356 = vld [vmem:[%s226] sm:$0xff]
        %v357 = vld [vmem:[%s226 + $0x8] sm:$0xf]
        %v359 = vcombine.high %v356, %v356
        %v361 = vpack.c.bf16 %v356, %v356
        %v362 = vpack.c.bf16 %v359, %v359
        %v363 = vpack.c.bf16 %v357, %v357
        %v367 = vunpack.c.l.b16 %v361
        %v368 = vunpack.c.l.b16 %v362
        %v369 = vunpack.c.l.b16 %v363
        %v370 = vpack.c.b16 %v368, %v367
        %v371 = vpack.c.b16 %v369, %v369
        %v372 = vrot.slane %v370, 6
        %v373 = vrot.slane %v371, 6
        %374 = vrot.lane.b32.xlu0 %v372, 109
        %v375 = vpop.permute.xlu0 %374
        %376 = vrot.lane.b32.xlu0 %v373, 109
        %v377 = vpop.permute.xlu0 %376
        %v378 = vrot.slane %v375, 4
        %v379 = vrot.slane %v377, 4
        %v380 = vsel %vm318, %v378, %v379
        %vm381 = vcmask 891904
        %v382 = vsel %vm381, %v375, %v380
        %385 = vst [vmem:[#allocation2 + $0xc] sm:$0xcc] %v382
        %386 = vst.msk [vmem:[#allocation2 + $0x14] sm:$0xc] %vm325, %v377
        %v387 = vld [vmem:[#allocation6] sm:$0xf]
        %v388 = vld [vmem:[#allocation2] sm:$0xff]
        %v389 = vld [vmem:[#allocation2 + $0x8] sm:$0xf]
        %v390 = vld [vmem:[#allocation2 + $0xc] sm:$0xff]
        %v391 = vld [vmem:[#allocation2 + $0x14] sm:$0xf]
        %v396 = vunpack.c.l.b16 %v388
        %v397 = vunpack.c.h.b16 %v388
        %v398 = vunpack.c.l.b16 %v389
        %v399 = vunpack.c.l.b16 %v390
        %v400 = vunpack.c.h.b16 %v390
        %v401 = vunpack.c.l.b16 %v391
        %v402 = vpack.c.b16 %v399, %v396
        %v403 = vpack.c.b16 %v400, %v397
        %v404 = vpack.c.b16 %v401, %v398
        %vm408 = vcmask 130048
        %v410 = vsel %vm408, %v387, 0
        %412 = vmatprep.subr.bf16.mxu0 0
        %413 = vmatpush1.bf16.msra.mxu0 0
        %414 = vmatprep.subr.bf16.mxu0 0
        %415 = vmatpush1.bf16.msra.mxu0 0
        %416 = vmatprep.subr.bf16.mxu0 0
        %417 = vmatpush1.bf16.msra.mxu0 0
        %418 = vmatprep.subr.bf16.mxu0 0
        %419 = vmatpush1.bf16.msra.mxu0 0
        %420 = vmatprep.subr.bf16.mxu0 0
        %421 = vmatpush1.bf16.msra.mxu0 0
        %422 = vmatprep.subr.bf16.mxu0 0
        %423 = vmatpush1.bf16.msra.mxu0 0
        %424 = vmatprep.subr.bf16.mxu0 0
        %425 = vmatpush1.bf16.msra.mxu0 0
        %426 = vmatprep.subr.bf16.mxu0 %v403
        %427 = vmatpush1.bf16.msra.mxu0 %v402
        %428 = vmatprep.subr.bf16.mxu0 0
        %429 = vmatpush2.bf16.msra.mxu0 0
        %430 = vmatprep.subr.bf16.mxu0 0
        %431 = vmatpush2.bf16.msra.mxu0 0
        %432 = vmatprep.subr.bf16.mxu0 0
        %433 = vmatpush2.bf16.msra.mxu0 0
        %434 = vmatprep.subr.bf16.mxu0 0
        %435 = vmatpush2.bf16.msra.mxu0 0
        %436 = vmatprep.subr.bf16.mxu0 0
        %437 = vmatpush2.bf16.msra.mxu0 0
        %438 = vmatprep.subr.bf16.mxu0 0
        %439 = vmatpush2.bf16.msra.mxu0 0
        %440 = vmatprep.subr.bf16.mxu0 0
        %441 = vmatpush2.bf16.msra.mxu0 0
        %442 = vmatprep.subr.bf16.mxu0 0
        %443 = vmatpush2.bf16.msra.mxu0 0
        %444 = vmatprep.mubr.bf16.mxu0 0
        %445 = vmatmul.mubr.bf16.gmra.mxu0 %v410
        %v446 = vpop.f32.mrf.mxu0
        %v447 = vadd.f32 0.0, %v446
        %v448 = vpop.f32.mrf.mxu0
        %v449 = vadd.f32 0.0, %v448
        %v450 = vpop.f32.mrf.mxu0
        %v451 = vpop.f32.mrf.mxu0
        %452 = vdwg.mxu0
        %453 = vmatprep.subr.bf16.mxu0 0
        %454 = vmatpush1.bf16.msra.mxu0 0
        %455 = vmatprep.subr.bf16.mxu0 0
        %456 = vmatpush1.bf16.msra.mxu0 0
        %457 = vmatprep.subr.bf16.mxu0 0
        %458 = vmatpush1.bf16.msra.mxu0 0
        %459 = vmatprep.subr.bf16.mxu0 0
        %460 = vmatpush1.bf16.msra.mxu0 0
        %461 = vmatprep.subr.bf16.mxu0 0
        %462 = vmatpush1.bf16.msra.mxu0 0
        %463 = vmatprep.subr.bf16.mxu0 0
        %464 = vmatpush1.bf16.msra.mxu0 0
        %465 = vmatprep.subr.bf16.mxu0 0
        %466 = vmatpush1.bf16.msra.mxu0 0
        %467 = vmatprep.subr.bf16.mxu0 0
        %468 = vmatpush1.bf16.msra.mxu0 %v404
        %469 = vmatprep.subr.bf16.mxu0 0
        %470 = vmatpush2.bf16.msra.mxu0 0
        %471 = vmatprep.subr.bf16.mxu0 0
        %472 = vmatpush2.bf16.msra.mxu0 0
        %473 = vmatprep.subr.bf16.mxu0 0
        %474 = vmatpush2.bf16.msra.mxu0 0
        %475 = vmatprep.subr.bf16.mxu0 0
        %476 = vmatpush2.bf16.msra.mxu0 0
        %477 = vmatprep.subr.bf16.mxu0 0
        %478 = vmatpush2.bf16.msra.mxu0 0
        %479 = vmatprep.subr.bf16.mxu0 0
        %480 = vmatpush2.bf16.msra.mxu0 0
        %481 = vmatprep.subr.bf16.mxu0 0
        %482 = vmatpush2.bf16.msra.mxu0 0
        %483 = vmatprep.subr.bf16.mxu0 0
        %484 = vmatpush2.bf16.msra.mxu0 0
        %485 = vmatprep.mubr.bf16.mxu0 0
        %486 = vmatmul.mubr.bf16.gmra.mxu0 %v410
        %v487 = vpop.f32.mrf.mxu0
        %v488 = vadd.f32 0.0, %v487
        %v489 = vpop.f32.mrf.mxu0
        %v490 = vpop.f32.mrf.mxu0
        %v491 = vpop.f32.mrf.mxu0
        %492 = vdwg.mxu0
        %v493 = vpack.c.bf16 %v447, %v447
        %v494 = vpack.c.bf16 %v449, %v449
        %v495 = vpack.c.bf16 %v488, %v488
        %v499 = vunpack.c.l.b16 %v493
        %v500 = vunpack.c.l.b16 %v494
        %v501 = vunpack.c.l.b16 %v495
        %v502 = vpack.c.b16 %v500, %v499
        %v503 = vpack.c.b16 %v501, %v501
        %506 = vst [vmem:[%s252] sm:$0xff] %v502
        %vm507 = vcmask 257024
        %508 = vst.msk [vmem:[%s252 + $0x8] sm:$0xf] %vm507, %v503
        %v510 = vlaneseq
        %v511 = vshrl.u32 %v510, 7
        %v512 = vsub.s32 0, %v511
        %v513 = vrot.slane %v272, %v512
        %v514 = vlaneseq
        %v515 = vshrl.u32 %v514, 7
        %v516 = vsub.s32 1, %v515
        %v517 = vrot.slane %v272, %v516
        %v518 = vlaneseq
        %v519 = vshrl.u32 %v518, 7
        %v520 = vsub.s32 2, %v519
        %v521 = vrot.slane %v272, %v520
        %v525 = vmul.f32 %v447, %v513
        %v526 = vmul.f32 %v449, %v517
        %v527 = vmul.f32 %v488, %v521
        %v528 = vadd.f32 %v525, %v526
        %vm529 = vcmask 261120
        %v530 = vsel %vm529, %v527, 0.0
        %v531 = vadd.f32 %v528, %v530
        %532 = vadd.xlane.f32.xlu0 %v531
        %v533 = vpop.xlane.xlu0 %532
        %v534 = vadd.f32 %v533, 0.0
        %v535 = vmul.f32 %v525, %v447
        %v536 = vmul.f32 %v526, %v449
        %v537 = vmul.f32 %v527, %v488
        %v538 = vadd.f32 %v535, %v536
        %v539 = vsel %vm529, %v537, 0.0
        %v540 = vadd.f32 %v538, %v539
        %541 = vadd.xlane.f32.xlu0 %v540
        %v542 = vpop.xlane.xlu0 %541
        %v543 = vadd.f32 %v542, 0.0
        %v544 = vld [vmem:[%s226] sm:$0xff]
        %v545 = vld [vmem:[%s226 + $0x8] sm:$0xf]
        %v547 = vcombine.high %v544, %v544
        %v549 = vpack.c.bf16 %v544, %v544
        %v550 = vpack.c.bf16 %v547, %v547
        %v551 = vpack.c.bf16 %v545, %v545
        %v555 = vunpack.c.l.b16 %v549
        %v556 = vunpack.c.l.b16 %v550
        %v557 = vunpack.c.l.b16 %v551
        %v558 = vpack.c.b16 %v556, %v555
        %v559 = vpack.c.b16 %v557, %v557
        %560 = vrot.lane.b32.xlu0 %v558, 127
        %v561 = vpop.permute.xlu0 %560
        %562 = vrot.lane.b32.xlu0 %v559, 127
        %v563 = vpop.permute.xlu0 %562
        %v564 = vrot.slane %v561, 4
        %v565 = vrot.slane %v563, 4
        %v566 = vsel %vm318, %v564, %v565
        %v567 = vsel %vm320, %v561, %v566
        %s570 = scalar_lea.vmem [#allocation2], 24
        %571 = vst [vmem:[%s570] sm:$0x33] %v567
        %572 = vst.msk [vmem:[%s570 + $0x8] sm:$0x3] %vm292, %v563
        %v573 = vld [vmem:[%s226] sm:$0xff]
        %v574 = vld [vmem:[%s226 + $0x8] sm:$0xf]
        %v576 = vcombine.high %v573, %v573
        %v578 = vpack.c.bf16 %v573, %v573
        %v579 = vpack.c.bf16 %v576, %v576
        %v580 = vpack.c.bf16 %v574, %v574
        %v584 = vunpack.c.l.b16 %v578
        %v585 = vunpack.c.l.b16 %v579
        %v586 = vunpack.c.l.b16 %v580
        %v587 = vpack.c.b16 %v585, %v584
        %v588 = vpack.c.b16 %v586, %v586
        %v589 = vrot.slane %v587, 6
        %v590 = vrot.slane %v588, 6
        %591 = vrot.lane.b32.xlu0 %v589, 126
        %v592 = vpop.permute.xlu0 %591
        %593 = vrot.lane.b32.xlu0 %v590, 126
        %v594 = vpop.permute.xlu0 %593
        %v595 = vrot.slane %v592, 4
        %v596 = vrot.slane %v594, 4
        %v597 = vsel %vm318, %v595, %v596
        %vm598 = vcmask 1031168
        %v599 = vsel %vm598, %v592, %v597
        %602 = vst [vmem:[%s570] sm:$0xcc] %v599
        %603 = vst.msk [vmem:[%s570 + $0x8] sm:$0xc] %vm325, %v594
        %v604 = vld [vmem:[%s226] sm:$0xff]
        %v605 = vld [vmem:[%s226 + $0x8] sm:$0xf]
        %v607 = vcombine.high %v604, %v604
        %v609 = vpack.c.bf16 %v604, %v604
        %v610 = vpack.c.bf16 %v607, %v607
        %v611 = vpack.c.bf16 %v605, %v605
        %v615 = vunpack.c.l.b16 %v609
        %v616 = vunpack.c.l.b16 %v610
        %v617 = vunpack.c.l.b16 %v611
        %v618 = vpack.c.b16 %v616, %v615
        %v619 = vpack.c.b16 %v617, %v617
        %620 = vrot.lane.b32.xlu0 %v618, 109
        %v621 = vpop.permute.xlu0 %620
        %622 = vrot.lane.b32.xlu0 %v619, 109
        %v623 = vpop.permute.xlu0 %622
        %v624 = vrot.slane %v621, 4
        %v625 = vrot.slane %v623, 4
        %v626 = vsel %vm318, %v624, %v625
        %v627 = vsel %vm381, %v621, %v626
        %630 = vst [vmem:[%s570 + $0xc] sm:$0x33] %v627
        %631 = vst.msk [vmem:[%s570 + $0x14] sm:$0x3] %vm292, %v623
        %v632 = vld [vmem:[%s226] sm:$0xff]
        %v633 = vld [vmem:[%s226 + $0x8] sm:$0xf]
        %v635 = vcombine.high %v632, %v632
        %v637 = vpack.c.bf16 %v632, %v632
        %v638 = vpack.c.bf16 %v635, %v635
        %v639 = vpack.c.bf16 %v633, %v633
        %v643 = vunpack.c.l.b16 %v637
        %v644 = vunpack.c.l.b16 %v638
        %v645 = vunpack.c.l.b16 %v639
        %v646 = vpack.c.b16 %v644, %v643
        %v647 = vpack.c.b16 %v645, %v645
        %v648 = vrot.slane %v646, 6
        %v649 = vrot.slane %v647, 6
        %650 = vrot.lane.b32.xlu0 %v648, 108
        %v651 = vpop.permute.xlu0 %650
        %652 = vrot.lane.b32.xlu0 %v649, 108
        %v653 = vpop.permute.xlu0 %652
        %v654 = vrot.slane %v651, 4
        %v655 = vrot.slane %v653, 4
        %v656 = vsel %vm318, %v654, %v655
        %vm657 = vcmask 883712
        %v658 = vsel %vm657, %v651, %v656
        %661 = vst [vmem:[%s570 + $0xc] sm:$0xcc] %v658
        %662 = vst.msk [vmem:[%s570 + $0x14] sm:$0xc] %vm325, %v653
        %s663 = scalar_lea.vmem [#allocation6], 4
        %v664 = vld [vmem:[%s663] sm:$0xf]
        %v665 = vld [vmem:[%s570] sm:$0xff]
        %v666 = vld [vmem:[%s570 + $0x8] sm:$0xf]
        %v667 = vld [vmem:[%s570 + $0xc] sm:$0xff]
        %v668 = vld [vmem:[%s570 + $0x14] sm:$0xf]
        %v673 = vunpack.c.l.b16 %v665
        %v674 = vunpack.c.h.b16 %v665
        %v675 = vunpack.c.l.b16 %v666
        %v676 = vunpack.c.l.b16 %v667
        %v677 = vunpack.c.h.b16 %v667
        %v678 = vunpack.c.l.b16 %v668
        %v679 = vpack.c.b16 %v676, %v673
        %v680 = vpack.c.b16 %v677, %v674
        %v681 = vpack.c.b16 %v678, %v675
        %v686 = vsel %vm408, %v664, 0
        %688 = vmatprep.subr.bf16.mxu0 0
        %689 = vmatpush1.bf16.msra.mxu0 0
        %690 = vmatprep.subr.bf16.mxu0 0
        %691 = vmatpush1.bf16.msra.mxu0 0
        %692 = vmatprep.subr.bf16.mxu0 0
        %693 = vmatpush1.bf16.msra.mxu0 0
        %694 = vmatprep.subr.bf16.mxu0 0
        %695 = vmatpush1.bf16.msra.mxu0 0
        %696 = vmatprep.subr.bf16.mxu0 0
        %697 = vmatpush1.bf16.msra.mxu0 0
        %698 = vmatprep.subr.bf16.mxu0 0
        %699 = vmatpush1.bf16.msra.mxu0 0
        %700 = vmatprep.subr.bf16.mxu0 0
        %701 = vmatpush1.bf16.msra.mxu0 0
        %702 = vmatprep.subr.bf16.mxu0 %v680
        %703 = vmatpush1.bf16.msra.mxu0 %v679
        %704 = vmatprep.subr.bf16.mxu0 0
        %705 = vmatpush2.bf16.msra.mxu0 0
        %706 = vmatprep.subr.bf16.mxu0 0
        %707 = vmatpush2.bf16.msra.mxu0 0
        %708 = vmatprep.subr.bf16.mxu0 0
        %709 = vmatpush2.bf16.msra.mxu0 0
        %710 = vmatprep.subr.bf16.mxu0 0
        %711 = vmatpush2.bf16.msra.mxu0 0
        %712 = vmatprep.subr.bf16.mxu0 0
        %713 = vmatpush2.bf16.msra.mxu0 0
        %714 = vmatprep.subr.bf16.mxu0 0
        %715 = vmatpush2.bf16.msra.mxu0 0
        %716 = vmatprep.subr.bf16.mxu0 0
        %717 = vmatpush2.bf16.msra.mxu0 0
        %718 = vmatprep.subr.bf16.mxu0 0
        %719 = vmatpush2.bf16.msra.mxu0 0
        %720 = vmatprep.mubr.bf16.mxu0 0
        %721 = vmatmul.mubr.bf16.gmra.mxu0 %v686
        %v722 = vpop.f32.mrf.mxu0
        %v723 = vadd.f32 0.0, %v722
        %v724 = vpop.f32.mrf.mxu0
        %v725 = vadd.f32 0.0, %v724
        %v726 = vpop.f32.mrf.mxu0
        %v727 = vpop.f32.mrf.mxu0
        %728 = vdwg.mxu0
        %729 = vmatprep.subr.bf16.mxu0 0
        %730 = vmatpush1.bf16.msra.mxu0 0
        %731 = vmatprep.subr.bf16.mxu0 0
        %732 = vmatpush1.bf16.msra.mxu0 0
        %733 = vmatprep.subr.bf16.mxu0 0
        %734 = vmatpush1.bf16.msra.mxu0 0
        %735 = vmatprep.subr.bf16.mxu0 0
        %736 = vmatpush1.bf16.msra.mxu0 0
        %737 = vmatprep.subr.bf16.mxu0 0
        %738 = vmatpush1.bf16.msra.mxu0 0
        %739 = vmatprep.subr.bf16.mxu0 0
        %740 = vmatpush1.bf16.msra.mxu0 0
        %741 = vmatprep.subr.bf16.mxu0 0
        %742 = vmatpush1.bf16.msra.mxu0 0
        %743 = vmatprep.subr.bf16.mxu0 0
        %744 = vmatpush1.bf16.msra.mxu0 %v681
        %745 = vmatprep.subr.bf16.mxu0 0
        %746 = vmatpush2.bf16.msra.mxu0 0
        %747 = vmatprep.subr.bf16.mxu0 0
        %748 = vmatpush2.bf16.msra.mxu0 0
        %749 = vmatprep.subr.bf16.mxu0 0
        %750 = vmatpush2.bf16.msra.mxu0 0
        %751 = vmatprep.subr.bf16.mxu0 0
        %752 = vmatpush2.bf16.msra.mxu0 0
        %753 = vmatprep.subr.bf16.mxu0 0
        %754 = vmatpush2.bf16.msra.mxu0 0
        %755 = vmatprep.subr.bf16.mxu0 0
        %756 = vmatpush2.bf16.msra.mxu0 0
        %757 = vmatprep.subr.bf16.mxu0 0
        %758 = vmatpush2.bf16.msra.mxu0 0
        %759 = vmatprep.subr.bf16.mxu0 0
        %760 = vmatpush2.bf16.msra.mxu0 0
        %761 = vmatprep.mubr.bf16.mxu0 0
        %762 = vmatmul.mubr.bf16.gmra.mxu0 %v686
        %v763 = vpop.f32.mrf.mxu0
        %v764 = vadd.f32 0.0, %v763
        %v765 = vpop.f32.mrf.mxu0
        %v766 = vpop.f32.mrf.mxu0
        %v767 = vpop.f32.mrf.mxu0
        %768 = vdwg.mxu0
        %v769 = vpack.c.bf16 %v723, %v723
        %v770 = vpack.c.bf16 %v725, %v725
        %v771 = vpack.c.bf16 %v764, %v764
        %v775 = vunpack.c.l.b16 %v769
        %v776 = vunpack.c.l.b16 %v770
        %v777 = vunpack.c.l.b16 %v771
        %v778 = vpack.c.b16 %v776, %v775
        %v779 = vpack.c.b16 %v777, %v777
        %s782 = scalar_lea.vmem %s252, 12 [#allocation8]
        %783 = vst [vmem:[%s782] sm:$0xff] %v778
        %784 = vst.msk [vmem:[%s782 + $0x8] sm:$0xf] %vm507, %v779
        %v785 = vmul.f32 %v723, %v513
        %v786 = vmul.f32 %v725, %v517
        %v787 = vmul.f32 %v764, %v521
        %v788 = vadd.f32 %v785, %v786
        %v789 = vsel %vm529, %v787, 0.0
        %v790 = vadd.f32 %v788, %v789
        %791 = vadd.xlane.f32.xlu0 %v790
        %v792 = vpop.xlane.xlu0 %791
        %v793 = vadd.f32 %v534, %v792
        %v794 = vmul.f32 %v785, %v723
        %v795 = vmul.f32 %v786, %v725
        %v796 = vmul.f32 %v787, %v764
        %v797 = vadd.f32 %v794, %v795
        %v798 = vsel %vm529, %v796, 0.0
        %v799 = vadd.f32 %v797, %v798
        %800 = vadd.xlane.f32.xlu0 %v799
        %v801 = vpop.xlane.xlu0 %800
        %v802 = vadd.f32 %v543, %v801
        %v803 = vld [vmem:[%s226] sm:$0xff]
        %v804 = vld [vmem:[%s226 + $0x8] sm:$0xf]
        %v806 = vcombine.high %v803, %v803
        %v808 = vpack.c.bf16 %v803, %v803
        %v809 = vpack.c.bf16 %v806, %v806
        %v810 = vpack.c.bf16 %v804, %v804
        %v814 = vunpack.c.l.b16 %v808
        %v815 = vunpack.c.l.b16 %v809
        %v816 = vunpack.c.l.b16 %v810
        %v817 = vpack.c.b16 %v815, %v814
        %v818 = vpack.c.b16 %v816, %v816
        %819 = vrot.lane.b32.xlu0 %v817, 110
        %v820 = vpop.permute.xlu0 %819
        %821 = vrot.lane.b32.xlu0 %v818, 110
        %v822 = vpop.permute.xlu0 %821
        %v823 = vrot.slane %v820, 4
        %v824 = vrot.slane %v822, 4
        %v825 = vsel %vm318, %v823, %v824
        %v826 = vsel %vm350, %v820, %v825
        %829 = vst [vmem:[#allocation2] sm:$0x33] %v826
        %830 = vst.msk [vmem:[#allocation2 + $0x8] sm:$0x3] %vm292, %v822
        %v831 = vld [vmem:[%s226] sm:$0xff]
        %v832 = vld [vmem:[%s226 + $0x8] sm:$0xf]
        %v834 = vcombine.high %v831, %v831
        %v836 = vpack.c.bf16 %v831, %v831
        %v837 = vpack.c.bf16 %v834, %v834
        %v838 = vpack.c.bf16 %v832, %v832
        %v842 = vunpack.c.l.b16 %v836
        %v843 = vunpack.c.l.b16 %v837
        %v844 = vunpack.c.l.b16 %v838
        %v845 = vpack.c.b16 %v843, %v842
        %v846 = vpack.c.b16 %v844, %v844
        %v847 = vrot.slane %v845, 6
        %v848 = vrot.slane %v846, 6
        %849 = vrot.lane.b32.xlu0 %v847, 109
        %v850 = vpop.permute.xlu0 %849
        %851 = vrot.lane.b32.xlu0 %v848, 109
        %v852 = vpop.permute.xlu0 %851
        %v853 = vrot.slane %v850, 4
        %v854 = vrot.slane %v852, 4
        %v855 = vsel %vm318, %v853, %v854
        %v856 = vsel %vm381, %v850, %v855
        %859 = vst [vmem:[#allocation2] sm:$0xcc] %v856
        %860 = vst.msk [vmem:[#allocation2 + $0x8] sm:$0xc] %vm325, %v852
        %v861 = vld [vmem:[%s226] sm:$0xff]
        %v862 = vld [vmem:[%s226 + $0x8] sm:$0xf]
        %v864 = vcombine.high %v861, %v861
        %v866 = vpack.c.bf16 %v861, %v861
        %v867 = vpack.c.bf16 %v864, %v864
        %v868 = vpack.c.bf16 %v862, %v862
        %v872 = vunpack.c.l.b16 %v866
        %v873 = vunpack.c.l.b16 %v867
        %v874 = vunpack.c.l.b16 %v868
        %v875 = vpack.c.b16 %v873, %v872
        %v876 = vpack.c.b16 %v874, %v874
        %877 = vrot.lane.b32.xlu0 %v875, 92
        %v878 = vpop.permute.xlu0 %877
        %879 = vrot.lane.b32.xlu0 %v876, 92
        %v880 = vpop.permute.xlu0 %879
        %v881 = vrot.slane %v878, 4
        %v882 = vrot.slane %v880, 4
        %v883 = vsel %vm318, %v881, %v882
        %vm884 = vcmask 752640
        %v885 = vsel %vm884, %v878, %v883
        %888 = vst [vmem:[#allocation2 + $0xc] sm:$0x33] %v885
        %889 = vst.msk [vmem:[#allocation2 + $0x14] sm:$0x3] %vm292, %v880
        %v890 = vld [vmem:[%s226] sm:$0xff]
        %v891 = vld [vmem:[%s226 + $0x8] sm:$0xf]
        %v893 = vcombine.high %v890, %v890
        %v895 = vpack.c.bf16 %v890, %v890
        %v896 = vpack.c.bf16 %v893, %v893
        %v897 = vpack.c.bf16 %v891, %v891
        %v901 = vunpack.c.l.b16 %v895
        %v902 = vunpack.c.l.b16 %v896
        %v903 = vunpack.c.l.b16 %v897
        %v904 = vpack.c.b16 %v902, %v901
        %v905 = vpack.c.b16 %v903, %v903
        %v906 = vrot.slane %v904, 6
        %v907 = vrot.slane %v905, 6
        %908 = vrot.lane.b32.xlu0 %v906, 91
        %v909 = vpop.permute.xlu0 %908
        %910 = vrot.lane.b32.xlu0 %v907, 91
        %v911 = vpop.permute.xlu0 %910
        %v912 = vrot.slane %v909, 4
        %v913 = vrot.slane %v911, 4
        %v914 = vsel %vm318, %v912, %v913
        %vm915 = vcmask 744448
        %v916 = vsel %vm915, %v909, %v914
        %919 = vst [vmem:[#allocation2 + $0xc] sm:$0xcc] %v916
        %920 = vst.msk [vmem:[#allocation2 + $0x14] sm:$0xc] %vm325, %v911
        %s921 = scalar_lea.vmem [#allocation6], 8
        %v922 = vld [vmem:[%s921] sm:$0xf]
        %v923 = vld [vmem:[#allocation2] sm:$0xff]
        %v924 = vld [vmem:[#allocation2 + $0x8] sm:$0xf]
        %v925 = vld [vmem:[#allocation2 + $0xc] sm:$0xff]
        %v926 = vld [vmem:[#allocation2 + $0x14] sm:$0xf]
        %v931 = vunpack.c.l.b16 %v923
        %v932 = vunpack.c.h.b16 %v923
        %v933 = vunpack.c.l.b16 %v924
        %v934 = vunpack.c.l.b16 %v925
        %v935 = vunpack.c.h.b16 %v925
        %v936 = vunpack.c.l.b16 %v926
        %v937 = vpack.c.b16 %v934, %v931
        %v938 = vpack.c.b16 %v935, %v932
        %v939 = vpack.c.b16 %v936, %v933
        %v944 = vsel %vm408, %v922, 0
        %946 = vmatprep.subr.bf16.mxu0 0
        %947 = vmatpush1.bf16.msra.mxu0 0
        %948 = vmatprep.subr.bf16.mxu0 0
        %949 = vmatpush1.bf16.msra.mxu0 0
        %950 = vmatprep.subr.bf16.mxu0 0
        %951 = vmatpush1.bf16.msra.mxu0 0
        %952 = vmatprep.subr.bf16.mxu0 0
        %953 = vmatpush1.bf16.msra.mxu0 0
        %954 = vmatprep.subr.bf16.mxu0 0
        %955 = vmatpush1.bf16.msra.mxu0 0
        %956 = vmatprep.subr.bf16.mxu0 0
        %957 = vmatpush1.bf16.msra.mxu0 0
        %958 = vmatprep.subr.bf16.mxu0 0
        %959 = vmatpush1.bf16.msra.mxu0 0
        %960 = vmatprep.subr.bf16.mxu0 %v938
        %961 = vmatpush1.bf16.msra.mxu0 %v937
        %962 = vmatprep.subr.bf16.mxu0 0
        %963 = vmatpush2.bf16.msra.mxu0 0
        %964 = vmatprep.subr.bf16.mxu0 0
        %965 = vmatpush2.bf16.msra.mxu0 0
        %966 = vmatprep.subr.bf16.mxu0 0
        %967 = vmatpush2.bf16.msra.mxu0 0
        %968 = vmatprep.subr.bf16.mxu0 0
        %969 = vmatpush2.bf16.msra.mxu0 0
        %970 = vmatprep.subr.bf16.mxu0 0
        %971 = vmatpush2.bf16.msra.mxu0 0
        %972 = vmatprep.subr.bf16.mxu0 0
        %973 = vmatpush2.bf16.msra.mxu0 0
        %974 = vmatprep.subr.bf16.mxu0 0
        %975 = vmatpush2.bf16.msra.mxu0 0
        %976 = vmatprep.subr.bf16.mxu0 0
        %977 = vmatpush2.bf16.msra.mxu0 0
        %978 = vmatprep.mubr.bf16.mxu0 0
        %979 = vmatmul.mubr.bf16.gmra.mxu0 %v944
        %v980 = vpop.f32.mrf.mxu0
        %v981 = vadd.f32 0.0, %v980
        %v982 = vpop.f32.mrf.mxu0
        %v983 = vadd.f32 0.0, %v982
        %v984 = vpop.f32.mrf.mxu0
        %v985 = vpop.f32.mrf.mxu0
        %986 = vdwg.mxu0
        %987 = vmatprep.subr.bf16.mxu0 0
        %988 = vmatpush1.bf16.msra.mxu0 0
        %989 = vmatprep.subr.bf16.mxu0 0
        %990 = vmatpush1.bf16.msra.mxu0 0
        %991 = vmatprep.subr.bf16.mxu0 0
        %992 = vmatpush1.bf16.msra.mxu0 0
        %993 = vmatprep.subr.bf16.mxu0 0
        %994 = vmatpush1.bf16.msra.mxu0 0
        %995 = vmatprep.subr.bf16.mxu0 0
        %996 = vmatpush1.bf16.msra.mxu0 0
        %997 = vmatprep.subr.bf16.mxu0 0
        %998 = vmatpush1.bf16.msra.mxu0 0
        %999 = vmatprep.subr.bf16.mxu0 0
        %1000 = vmatpush1.bf16.msra.mxu0 0
        %1001 = vmatprep.subr.bf16.mxu0 0
        %1002 = vmatpush1.bf16.msra.mxu0 %v939
        %1003 = vmatprep.subr.bf16.mxu0 0
        %1004 = vmatpush2.bf16.msra.mxu0 0
        %1005 = vmatprep.subr.bf16.mxu0 0
        %1006 = vmatpush2.bf16.msra.mxu0 0
        %1007 = vmatprep.subr.bf16.mxu0 0
        %1008 = vmatpush2.bf16.msra.mxu0 0
        %1009 = vmatprep.subr.bf16.mxu0 0
        %1010 = vmatpush2.bf16.msra.mxu0 0
        %1011 = vmatprep.subr.bf16.mxu0 0
        %1012 = vmatpush2.bf16.msra.mxu0 0
        %1013 = vmatprep.subr.bf16.mxu0 0
        %1014 = vmatpush2.bf16.msra.mxu0 0
        %1015 = vmatprep.subr.bf16.mxu0 0
        %1016 = vmatpush2.bf16.msra.mxu0 0
        %1017 = vmatprep.subr.bf16.mxu0 0
        %1018 = vmatpush2.bf16.msra.mxu0 0
        %1019 = vmatprep.mubr.bf16.mxu0 0
        %1020 = vmatmul.mubr.bf16.gmra.mxu0 %v944
        %v1021 = vpop.f32.mrf.mxu0
        %v1022 = vadd.f32 0.0, %v1021
        %v1023 = vpop.f32.mrf.mxu0
        %v1024 = vpop.f32.mrf.mxu0
        %v1025 = vpop.f32.mrf.mxu0
        %1026 = vdwg.mxu0
        %v1027 = vpack.c.bf16 %v981, %v981
        %v1028 = vpack.c.bf16 %v983, %v983
        %v1029 = vpack.c.bf16 %v1022, %v1022
        %v1033 = vunpack.c.l.b16 %v1027
        %v1034 = vunpack.c.l.b16 %v1028
        %v1035 = vunpack.c.l.b16 %v1029
        %v1036 = vpack.c.b16 %v1034, %v1033
        %v1037 = vpack.c.b16 %v1035, %v1035
        %s1040 = scalar_lea.vmem %s252, 24 [#allocation8]
        %1041 = vst [vmem:[%s1040] sm:$0xff] %v1036
        %1042 = vst.msk [vmem:[%s1040 + $0x8] sm:$0xf] %vm507, %v1037
        %v1043 = vmul.f32 %v981, %v513
        %v1044 = vmul.f32 %v983, %v517
        %v1045 = vmul.f32 %v1022, %v521
        %v1046 = vadd.f32 %v1043, %v1044
        %v1047 = vsel %vm529, %v1045, 0.0
        %v1048 = vadd.f32 %v1046, %v1047
        %1049 = vadd.xlane.f32.xlu0 %v1048
        %v1050 = vpop.xlane.xlu0 %1049
        %v1051 = vadd.f32 %v793, %v1050
        %v1052 = vmul.f32 %v1043, %v981
        %v1053 = vmul.f32 %v1044, %v983
        %v1054 = vmul.f32 %v1045, %v1022
        %v1055 = vadd.f32 %v1052, %v1053
        %v1056 = vsel %vm529, %v1054, 0.0
        %v1057 = vadd.f32 %v1055, %v1056
        %1058 = vadd.xlane.f32.xlu0 %v1057
        %v1059 = vpop.xlane.xlu0 %1058
        %v1060 = vadd.f32 %v802, %v1059
        %v1061 = vld [vmem:[%s226] sm:$0xff]
        %v1062 = vld [vmem:[%s226 + $0x8] sm:$0xf]
        %v1064 = vcombine.high %v1061, %v1061
        %v1066 = vpack.c.bf16 %v1061, %v1061
        %v1067 = vpack.c.bf16 %v1064, %v1064
        %v1068 = vpack.c.bf16 %v1062, %v1062
        %v1072 = vunpack.c.l.b16 %v1066
        %v1073 = vunpack.c.l.b16 %v1067
        %v1074 = vunpack.c.l.b16 %v1068
        %v1075 = vpack.c.b16 %v1073, %v1072
        %v1076 = vpack.c.b16 %v1074, %v1074
        %1077 = vrot.lane.b32.xlu0 %v1075, 109
        %v1078 = vpop.permute.xlu0 %1077
        %1079 = vrot.lane.b32.xlu0 %v1076, 109
        %v1080 = vpop.permute.xlu0 %1079
        %v1081 = vrot.slane %v1078, 4
        %v1082 = vrot.slane %v1080, 4
        %v1083 = vsel %vm318, %v1081, %v1082
        %v1084 = vsel %vm381, %v1078, %v1083
        %1087 = vst [vmem:[%s570] sm:$0x33] %v1084
        %1088 = vst.msk [vmem:[%s570 + $0x8] sm:$0x3] %vm292, %v1080
        %v1089 = vld [vmem:[%s226] sm:$0xff]
        %v1090 = vld [vmem:[%s226 + $0x8] sm:$0xf]
        %v1092 = vcombine.high %v1089, %v1089
        %v1094 = vpack.c.bf16 %v1089, %v1089
        %v1095 = vpack.c.bf16 %v1092, %v1092
        %v1096 = vpack.c.bf16 %v1090, %v1090
        %v1100 = vunpack.c.l.b16 %v1094
        %v1101 = vunpack.c.l.b16 %v1095
        %v1102 = vunpack.c.l.b16 %v1096
        %v1103 = vpack.c.b16 %v1101, %v1100
        %v1104 = vpack.c.b16 %v1102, %v1102
        %v1105 = vrot.slane %v1103, 6
        %v1106 = vrot.slane %v1104, 6
        %1107 = vrot.lane.b32.xlu0 %v1105, 108
        %v1108 = vpop.permute.xlu0 %1107
        %1109 = vrot.lane.b32.xlu0 %v1106, 108
        %v1110 = vpop.permute.xlu0 %1109
        %v1111 = vrot.slane %v1108, 4
        %v1112 = vrot.slane %v1110, 4
        %v1113 = vsel %vm318, %v1111, %v1112
        %v1114 = vsel %vm657, %v1108, %v1113
        %1117 = vst [vmem:[%s570] sm:$0xcc] %v1114
        %1118 = vst.msk [vmem:[%s570 + $0x8] sm:$0xc] %vm325, %v1110
        %v1119 = vld [vmem:[%s226] sm:$0xff]
        %v1120 = vld [vmem:[%s226 + $0x8] sm:$0xf]
        %v1122 = vcombine.high %v1119, %v1119
        %v1124 = vpack.c.bf16 %v1119, %v1119
        %v1125 = vpack.c.bf16 %v1122, %v1122
        %v1126 = vpack.c.bf16 %v1120, %v1120
        %v1130 = vunpack.c.l.b16 %v1124
        %v1131 = vunpack.c.l.b16 %v1125
        %v1132 = vunpack.c.l.b16 %v1126
        %v1133 = vpack.c.b16 %v1131, %v1130
        %v1134 = vpack.c.b16 %v1132, %v1132
        %1135 = vrot.lane.b32.xlu0 %v1133, 91
        %v1136 = vpop.permute.xlu0 %1135
        %1137 = vrot.lane.b32.xlu0 %v1134, 91
        %v1138 = vpop.permute.xlu0 %1137
        %v1139 = vrot.slane %v1136, 4
        %v1140 = vrot.slane %v1138, 4
        %v1141 = vsel %vm318, %v1139, %v1140
        %v1142 = vsel %vm915, %v1136, %v1141
        %1145 = vst [vmem:[%s570 + $0xc] sm:$0x33] %v1142
        %1146 = vst.msk [vmem:[%s570 + $0x14] sm:$0x3] %vm292, %v1138
        %v1147 = vld [vmem:[%s226] sm:$0xff]
        %v1148 = vld [vmem:[%s226 + $0x8] sm:$0xf]
        %v1150 = vcombine.high %v1147, %v1147
        %v1152 = vpack.c.bf16 %v1147, %v1147
        %v1153 = vpack.c.bf16 %v1150, %v1150
        %v1154 = vpack.c.bf16 %v1148, %v1148
        %v1158 = vunpack.c.l.b16 %v1152
        %v1159 = vunpack.c.l.b16 %v1153
        %v1160 = vunpack.c.l.b16 %v1154
        %v1161 = vpack.c.b16 %v1159, %v1158
        %v1162 = vpack.c.b16 %v1160, %v1160
        %v1163 = vrot.slane %v1161, 6
        %v1164 = vrot.slane %v1162, 6
        %1165 = vrot.lane.b32.xlu0 %v1163, 90
        %v1166 = vpop.permute.xlu0 %1165
        %1167 = vrot.lane.b32.xlu0 %v1164, 90
        %v1168 = vpop.permute.xlu0 %1167
        %v1169 = vrot.slane %v1166, 4
        %v1170 = vrot.slane %v1168, 4
        %v1171 = vsel %vm318, %v1169, %v1170
        %vm1172 = vcmask 736256
        %v1173 = vsel %vm1172, %v1166, %v1171
        %1176 = vst [vmem:[%s570 + $0xc] sm:$0xcc] %v1173
        %1177 = vst.msk [vmem:[%s570 + $0x14] sm:$0xc] %vm325, %v1168
        %s1178 = scalar_lea.vmem [#allocation6], 12
        %v1179 = vld [vmem:[%s1178] sm:$0xf]
        %v1180 = vld [vmem:[%s570] sm:$0xff]
        %v1181 = vld [vmem:[%s570 + $0x8] sm:$0xf]
        %v1182 = vld [vmem:[%s570 + $0xc] sm:$0xff]
        %v1183 = vld [vmem:[%s570 + $0x14] sm:$0xf]
        %v1188 = vunpack.c.l.b16 %v1180
        %v1189 = vunpack.c.h.b16 %v1180
        %v1190 = vunpack.c.l.b16 %v1181
        %v1191 = vunpack.c.l.b16 %v1182
        %v1192 = vunpack.c.h.b16 %v1182
        %v1193 = vunpack.c.l.b16 %v1183
        %v1194 = vpack.c.b16 %v1191, %v1188
        %v1195 = vpack.c.b16 %v1192, %v1189
        %v1196 = vpack.c.b16 %v1193, %v1190
        %v1201 = vsel %vm408, %v1179, 0
        %1203 = vmatprep.subr.bf16.mxu0 0
        %1204 = vmatpush1.bf16.msra.mxu0 0
        %1205 = vmatprep.subr.bf16.mxu0 0
        %1206 = vmatpush1.bf16.msra.mxu0 0
        %1207 = vmatprep.subr.bf16.mxu0 0
        %1208 = vmatpush1.bf16.msra.mxu0 0
        %1209 = vmatprep.subr.bf16.mxu0 0
        %1210 = vmatpush1.bf16.msra.mxu0 0
        %1211 = vmatprep.subr.bf16.mxu0 0
        %1212 = vmatpush1.bf16.msra.mxu0 0
        %1213 = vmatprep.subr.bf16.mxu0 0
        %1214 = vmatpush1.bf16.msra.mxu0 0
        %1215 = vmatprep.subr.bf16.mxu0 0
        %1216 = vmatpush1.bf16.msra.mxu0 0
        %1217 = vmatprep.subr.bf16.mxu0 %v1195
        %1218 = vmatpush1.bf16.msra.mxu0 %v1194
        %1219 = vmatprep.subr.bf16.mxu0 0
        %1220 = vmatpush2.bf16.msra.mxu0 0
        %1221 = vmatprep.subr.bf16.mxu0 0
        %1222 = vmatpush2.bf16.msra.mxu0 0
        %1223 = vmatprep.subr.bf16.mxu0 0
        %1224 = vmatpush2.bf16.msra.mxu0 0
        %1225 = vmatprep.subr.bf16.mxu0 0
        %1226 = vmatpush2.bf16.msra.mxu0 0
        %1227 = vmatprep.subr.bf16.mxu0 0
        %1228 = vmatpush2.bf16.msra.mxu0 0
        %1229 = vmatprep.subr.bf16.mxu0 0
        %1230 = vmatpush2.bf16.msra.mxu0 0
        %1231 = vmatprep.subr.bf16.mxu0 0
        %1232 = vmatpush2.bf16.msra.mxu0 0
        %1233 = vmatprep.subr.bf16.mxu0 0
        %1234 = vmatpush2.bf16.msra.mxu0 0
        %1235 = vmatprep.mubr.bf16.mxu0 0
        %1236 = vmatmul.mubr.bf16.gmra.mxu0 %v1201
        %v1237 = vpop.f32.mrf.mxu0
        %v1238 = vadd.f32 0.0, %v1237
        %v1239 = vpop.f32.mrf.mxu0
        %v1240 = vadd.f32 0.0, %v1239
        %v1241 = vpop.f32.mrf.mxu0
        %v1242 = vpop.f32.mrf.mxu0
        %1243 = vdwg.mxu0
        %1244 = vmatprep.subr.bf16.mxu0 0
        %1245 = vmatpush1.bf16.msra.mxu0 0
        %1246 = vmatprep.subr.bf16.mxu0 0
        %1247 = vmatpush1.bf16.msra.mxu0 0
        %1248 = vmatprep.subr.bf16.mxu0 0
        %1249 = vmatpush1.bf16.msra.mxu0 0
        %1250 = vmatprep.subr.bf16.mxu0 0
        %1251 = vmatpush1.bf16.msra.mxu0 0
        %1252 = vmatprep.subr.bf16.mxu0 0
        %1253 = vmatpush1.bf16.msra.mxu0 0
        %1254 = vmatprep.subr.bf16.mxu0 0
        %1255 = vmatpush1.bf16.msra.mxu0 0
        %1256 = vmatprep.subr.bf16.mxu0 0
        %1257 = vmatpush1.bf16.msra.mxu0 0
        %1258 = vmatprep.subr.bf16.mxu0 0
        %1259 = vmatpush1.bf16.msra.mxu0 %v1196
        %1260 = vmatprep.subr.bf16.mxu0 0
        %1261 = vmatpush2.bf16.msra.mxu0 0
        %1262 = vmatprep.subr.bf16.mxu0 0
        %1263 = vmatpush2.bf16.msra.mxu0 0
        %1264 = vmatprep.subr.bf16.mxu0 0
        %1265 = vmatpush2.bf16.msra.mxu0 0
        %1266 = vmatprep.subr.bf16.mxu0 0
        %1267 = vmatpush2.bf16.msra.mxu0 0
        %1268 = vmatprep.subr.bf16.mxu0 0
        %1269 = vmatpush2.bf16.msra.mxu0 0
        %1270 = vmatprep.subr.bf16.mxu0 0
        %1271 = vmatpush2.bf16.msra.mxu0 0
        %1272 = vmatprep.subr.bf16.mxu0 0
        %1273 = vmatpush2.bf16.msra.mxu0 0
        %1274 = vmatprep.subr.bf16.mxu0 0
        %1275 = vmatpush2.bf16.msra.mxu0 0
        %1276 = vmatprep.mubr.bf16.mxu0 0
        %1277 = vmatmul.mubr.bf16.gmra.mxu0 %v1201
        %v1278 = vpop.f32.mrf.mxu0
        %v1279 = vadd.f32 0.0, %v1278
        %v1280 = vpop.f32.mrf.mxu0
        %v1281 = vpop.f32.mrf.mxu0
        %v1282 = vpop.f32.mrf.mxu0
        %1283 = vdwg.mxu0
        %v1284 = vpack.c.bf16 %v1238, %v1238
        %v1285 = vpack.c.bf16 %v1240, %v1240
        %v1286 = vpack.c.bf16 %v1279, %v1279
        %v1290 = vunpack.c.l.b16 %v1284
        %v1291 = vunpack.c.l.b16 %v1285
        %v1292 = vunpack.c.l.b16 %v1286
        %v1293 = vpack.c.b16 %v1291, %v1290
        %v1294 = vpack.c.b16 %v1292, %v1292
        %s1297 = scalar_lea.vmem %s252, 36 [#allocation8]
        %1298 = vst [vmem:[%s1297] sm:$0xff] %v1293
        %1299 = vst.msk [vmem:[%s1297 + $0x8] sm:$0xf] %vm507, %v1294
        %v1300 = vmul.f32 %v1238, %v513
        %v1301 = vmul.f32 %v1240, %v517
        %v1302 = vmul.f32 %v1279, %v521
        %v1303 = vadd.f32 %v1300, %v1301
        %v1304 = vsel %vm529, %v1302, 0.0
        %v1305 = vadd.f32 %v1303, %v1304
        %1306 = vadd.xlane.f32.xlu0 %v1305
        %v1307 = vpop.xlane.xlu0 %1306
        %v1308 = vadd.f32 %v1051, %v1307
        %v1309 = vmul.f32 %v1300, %v1238
        %v1310 = vmul.f32 %v1301, %v1240
        %v1311 = vmul.f32 %v1302, %v1279
        %v1312 = vadd.f32 %v1309, %v1310
        %v1313 = vsel %vm529, %v1311, 0.0
        %v1314 = vadd.f32 %v1312, %v1313
        %1315 = vadd.xlane.f32.xlu0 %v1314
        %v1316 = vpop.xlane.xlu0 %1315
        %v1317 = vadd.f32 %v1060, %v1316
        %vm1318 = vcmask 7168
        %1319 = vst.msk [vmem:[%s270] sm:$0xff] %vm1318, %v1308
        %s1320 = scalar_lea.vmem %s270, 8
        %1321 = vst.msk [vmem:[%s1320] sm:$0xff] %vm1318, %v1317
        %s1322 = sand.u32 %s118, 1
        %s1323 = scalar_lea.sflag [#allocation5], %s1322
        %s1324 = sand.u32 %s118, 1
        %s1325 = smul.addr %s1324, 48
        %s1326 = scalar_lea.vmem [#allocation8], %s1325
        %p1327 = scmp.lt.s32.totalorder %s27, 1
        %s1328 = scalar_select %p1327, %s27, 1
        %p1329 = scmp.lt.s32.totalorder %s28, 0
        %s1330 = scalar_select %p1329, %s28, 0
        %s1331 = smul.addr %s1328, 2
        %s1332 = sadd.s32 %s1330, %s1331
        %s1333 = smul.addr %s1332, 8
        %s1334 = scalar_lea.vmem %s4, %s1333
        // Predicated region
        $region41: #{tpu_custom_call.1} parent=31 // pred_check
          %p1335 = pneg %p128
        $region42: #{tpu_custom_call.1} parent=31 // pred_check_branch
          %1337 = sbr.rel (%p1335) target = $region44
        $region43: #{tpu_custom_call.1} parent=31 // pred_region
          %s1339 = ssub.s32 768, 768
          %1340 = vsyncadd %s1323, %s1339
          %s1341 = smul.addr %s28, 3
          %s1342 = smul.addr %s27, 12
          %s1343 = sadd.s32 %s1341, %s1342
          %s1344 = smul.addr %s1343, 64
          %s1345 = scalar_lea.hbm %s3, %s1344
          %s1346 = sshll.u32 %s1326, 4
          %s1347 = int_to_ptr.vmem [resolvable:$true] %s1346
          %1352 = dma.vmem_to_hbm [thread:$0]  %s1347, 768, %s1345, %s1323, 192, 192, 12
        $region44: #{tpu_custom_call.1} parent=31 // pred_fallthru
          _
        // Predicated region
        $region45: #{tpu_custom_call.1} parent=31 // pred_check
          %p1353 = pneg %p156
        $region46: #{tpu_custom_call.1} parent=31 // pred_check_branch
          %1355 = sbr.rel (%p1353) target = $region48
        $region47: #{tpu_custom_call.1} parent=31 // pred_region
          _
        $region48: #{tpu_custom_call.1} parent=31 // pred_fallthru
          _
      $region32: #{tpu_custom_call.1} parent=5 // pred_fallthru
        _
      %p1356 = scmp.le.s32.totalorder 2, %s18
      // Predicated region
      $region49: #{tpu_custom_call.1} parent=5 // pred_check
        %p1357 = pneg %p1356
      $region50: #{tpu_custom_call.1} parent=5 // pred_check_branch
        %1359 = sbr.rel (%p1357) target = $region52
      $region51: #{tpu_custom_call.1} parent=5 // pred_region
        %s1360 = ssub.s32 %s18, 2
        // Predicated region
        $region53: #{tpu_custom_call.1} parent=51 // pred_check
          %p1361 = pneg %p134
        $region54: #{tpu_custom_call.1} parent=51 // pred_check_branch
          %1363 = sbr.rel (%p1361) target = $region56
        $region55: #{tpu_custom_call.1} parent=51 // pred_region
          %s1364 = sand.u32 %s119, 1
          %s1365 = scalar_lea.sflag [#allocation5], %s1364
          %s1366 = sand.u32 %s119, 1
          %s1367 = smul.addr %s1366, 48
          %s1368 = scalar_lea.vmem [#allocation8], %s1367
          %1369 = dma.done %s1365, 768
        $region56: #{tpu_custom_call.1} parent=51 // pred_fallthru
          _
        // Predicated region
        $region57: #{tpu_custom_call.1} parent=51 // pred_check
          %p1370 = pneg %p162
        $region58: #{tpu_custom_call.1} parent=51 // pred_check_branch
          %1372 = sbr.rel (%p1370) target = $region60
        $region59: #{tpu_custom_call.1} parent=51 // pred_region
          %p1373 = scmp.lt.s32.totalorder %s29, 1
          %s1374 = scalar_select %p1373, %s29, 1
          %p1375 = scmp.lt.s32.totalorder %s30, 0
          %s1376 = scalar_select %p1375, %s30, 0
          %s1377 = smul.addr %s1374, 2
          %s1378 = sadd.s32 %s1376, %s1377
          %s1379 = smul.addr %s1378, 8
          %s1380 = scalar_lea.vmem %s4, %s1379
        $region60: #{tpu_custom_call.1} parent=51 // pred_fallthru
          _
      $region52: #{tpu_custom_call.1} parent=5 // pred_fallthru
        _
    $region6: #{tpu_custom_call.1} parent=1 // loop_footer
      %s22 = sadd.s32 1, %s18
    $region7: #{tpu_custom_call.1} parent=1 // loop_footer_branch
      %17 = sbr.rel target = $region3
    $region8: #{tpu_custom_call.1} parent=1 // loop_exit
      _
    %1381 = vsyncpa [#allocation4], 1
    %s1382 = scalar_lea.sflag [#allocation4], 1
    %1383 = vsyncpa %s1382, 1
    %1384 = vsyncpa [#allocation7], 1
    %1385 = vsyncpa [#allocation5], 1
    %s1386 = scalar_lea.sflag [#allocation5], 1
    %1387 = vsyncpa %s1386, 1

</llo_original>
